<compile_context>
chip_gen: v5e
topology: v5e:2x2
jax: 0.10.0
libtpu: 0.0.40
codegen_flags: <defaults>
</compile_context>

<pallas_src>
import jax
import jax.numpy as jnp
from jax import lax
from jax.experimental import pallas as pl
from jax.experimental.pallas import tpu as pltpu


# ----------------------------------------------------------------------------
# Fused kernel: per batch element
#   pooled = maxpool2x2(x)
#   y1 = relu(conv3x3(pooled, w1_folded) + b1)
#   y2 = relu(conv3x3(y1,     w2_folded) + b2)
# Intermediates (zero-padded activations) are kept in VMEM scratch.
# ----------------------------------------------------------------------------
def _down_fused_kernel(x_ref, w1_ref, b1_ref, w2_ref, b2_ref, o_ref, p1_ref, p2_ref):
    # x_ref  : (1, H, W, Cin)       NHWC input tile (one batch element)
    # w1_ref : (9, Cin, Cmid)       conv1 taps (BN scale pre-folded)
    # b1_ref : (1, Cmid)            folded BN bias for conv1
    # w2_ref : (9, Cmid, Cout)      conv2 taps (BN scale pre-folded)
    # b2_ref : (1, Cout)            folded BN bias for conv2
    # o_ref  : (1, Ho, Wo, Cout)
    # p1_ref : (Ho+2, Wo+2, Cin)    VMEM scratch: zero-padded pooled activation
    # p2_ref : (Ho+2, Wo+2, Cmid)   VMEM scratch: zero-padded conv1 activation
    _, H, W, Cin = x_ref.shape
    Ho, Wo = H // 2, W // 2
    Cmid = w1_ref.shape[2]
    Cout = w2_ref.shape[2]

    # ---- 2x2 max pool, stride 2 (in-kernel, no wrapper rearrange) ----
    x = x_ref[0]                                        # (H, W, Cin)
    xr = x.reshape(Ho, 2, W, Cin)                       # split rows (major dim only)
    xv = jnp.maximum(xr[:, 0], xr[:, 1])                # vertical max   (Ho, W, Cin)
    xc = xv.reshape(Ho, Wo, 2, Cin)                     # split columns
    pooled = jnp.maximum(xc[:, :, 0, :], xc[:, :, 1, :])  # (Ho, Wo, Cin)

    # ---- conv1 (3x3, "same" via zero-padded VMEM scratch) + bias + ReLU ----
    p1_ref[...] = jnp.zeros_like(p1_ref)                # zero border == zero padding
    p1_ref[1:Ho + 1, 1:Wo + 1, :] = pooled

    acc1 = jnp.zeros((Ho * Wo, Cmid), jnp.float32)
    for idx in range(9):                                # static, fully unrolled
        dy, dx = idx // 3, idx % 3
        patch = p1_ref[dy:dy + Ho, dx:dx + Wo, :]       # (Ho, Wo, Cin)
        acc1 = acc1 + jnp.dot(patch.reshape(Ho * Wo, Cin), w1_ref[idx],
                              preferred_element_type=jnp.float32)
    y1 = jnp.maximum(acc1 + b1_ref[...], 0.0)           # (Ho*Wo, Cmid)

    # ---- conv2 (3x3, "same") + bias + ReLU ----
    p2_ref[...] = jnp.zeros_like(p2_ref)
    p2_ref[1:Ho + 1, 1:Wo + 1, :] = y1.reshape(Ho, Wo, Cmid)

    acc2 = jnp.zeros((Ho * Wo, Cout), jnp.float32)
    for idx in range(9):
        dy, dx = idx // 3, idx % 3
        patch = p2_ref[dy:dy + Ho, dx:dx + Wo, :]       # (Ho, Wo, Cmid)
        acc2 = acc2 + jnp.dot(patch.reshape(Ho * Wo, Cmid), w2_ref[idx],
                              preferred_element_type=jnp.float32)
    y2 = jnp.maximum(acc2 + b2_ref[...], 0.0)           # (Ho*Wo, Cout)

    o_ref[...] = y2.reshape(1, Ho, Wo, Cout).astype(o_ref.dtype)


def down_fused(x_nhwc, w1, b1, w2, b2):
    # x_nhwc: (N, H, W, Cin); w1: (9, Cin, Cmid); b1: (1, Cmid); w2: (9, Cmid, Cout); b2: (1, Cout)
    N, H, W, Cin = x_nhwc.shape
    Ho, Wo = H // 2, W // 2
    Cmid = w1.shape[2]
    Cout = w2.shape[2]
    return pl.pallas_call(
        _down_fused_kernel,
        out_shape=jax.ShapeDtypeStruct((N, Ho, Wo, Cout), x_nhwc.dtype),
        grid_spec=pltpu.PrefetchScalarGridSpec(
            num_scalar_prefetch=0,
            grid=(N,),  # >= 2 grid steps so both v7x TensorCores are used
            in_specs=[
                pl.BlockSpec((1, H, W, Cin), lambda n: (n, 0, 0, 0)),
                pl.BlockSpec((9, Cin, Cmid), lambda n: (0, 0, 0)),
                pl.BlockSpec((1, Cmid), lambda n: (0, 0)),
                pl.BlockSpec((9, Cmid, Cout), lambda n: (0, 0, 0)),
                pl.BlockSpec((1, Cout), lambda n: (0, 0)),
            ],
            out_specs=pl.BlockSpec((1, Ho, Wo, Cout), lambda n: (n, 0, 0, 0)),
            scratch_shapes=[
                pltpu.VMEM((Ho + 2, Wo + 2, Cin), jnp.float32),
                pltpu.VMEM((Ho + 2, Wo + 2, Cmid), jnp.float32),
            ],
        ),
        compiler_params=pltpu.CompilerParams(dimension_semantics=("parallel",)),
    )(x_nhwc, w1, b1, w2, b2)


# ----------------------------------------------------------------------------
# Parameter prep: fold eval-mode BatchNorm into the (bias-free) conv.
#   y = relu( (conv(x,w) - mean) * gamma/sqrt(var+eps) + beta )
#     = relu( conv(x, w * s) + (beta - mean * s) ),   s = gamma/sqrt(var+eps)
# ----------------------------------------------------------------------------
def fold_bn_into_conv(w_hwio, gamma, beta, mean, var, eps=1e-5):
    scale = gamma / jnp.sqrt(var + eps)                           # (Cout,)
    kh, kw, cin, cout = w_hwio.shape
    w9 = (w_hwio * scale[None, None, None, :]).reshape(kh * kw, cin, cout)
    bias = (beta - mean * scale)[None, :]                         # (1, Cout)
    return w9, bias


@jax.jit
def down_forward(x_nchw, params):
    x = jnp.transpose(x_nchw, (0, 2, 3, 1))            # NCHW -> NHWC (channels on lanes)
    y = down_fused(x, params["w1"], params["b1"], params["w2"], params["b2"])
    return jnp.transpose(y, (0, 3, 1, 2))              # NHWC -> NCHW


# ----------------------------------------------------------------------------
# Pure-JAX reference (uses the raw, unfolded BN parameters — also validates the fold).
# ----------------------------------------------------------------------------
def down_reference(x_nchw, raw):
    x = jnp.transpose(x_nchw, (0, 2, 3, 1))
    x = lax.reduce_window(x, -jnp.inf, lax.max, (1, 2, 2, 1), (1, 2, 2, 1), "VALID")

    def cbr(x, w, g, b, m, v):
        y = lax.conv_general_dilated(x, w, window_strides=(1, 1), padding="SAME",
                                     dimension_numbers=("NHWC", "HWIO", "NHWC"))
        y = (y - m) * (g / jnp.sqrt(v + raw["eps"])) + b
        return jnp.maximum(y, 0.0)

    x = cbr(x, raw["w1"], raw["g1"], raw["beta1"], raw["m1"], raw["v1"])
    x = cbr(x, raw["w2"], raw["g2"], raw["beta2"], raw["m2"], raw["v2"])
    return jnp.transpose(x, (0, 3, 1, 2))


if __name__ == "__main__":
    # Down(in_channels=4, out_channels=8); mid_channels = out_channels = 8.
    N, Cin, H, W = 2, 4, 16, 16
    Cmid = Cout = 8
    eps = 1e-5

    key = jax.random.PRNGKey(0)
    keys = jax.random.split(key, 11)

    # Conv weights in PyTorch (Cout, Cin, 3, 3) layout -> HWIO.
    w1_oihw = 0.1 * jax.random.normal(keys[0], (Cmid, Cin, 3, 3), jnp.float32)
    w2_oihw = 0.1 * jax.random.normal(keys[1], (Cout, Cmid, 3, 3), jnp.float32)
    w1_hwio = jnp.transpose(w1_oihw, (2, 3, 1, 0))
    w2_hwio = jnp.transpose(w2_oihw, (2, 3, 1, 0))

    # BatchNorm (eval mode) parameters — distinct PRNG keys for every tensor.
    g1    = 1.0 + 0.05 * jax.random.normal(keys[2], (Cmid,), jnp.float32)
    beta1 = 0.05 * jax.random.normal(keys[3], (Cmid,), jnp.float32)
    m1    = 0.1 * jax.random.normal(keys[4], (Cmid,), jnp.float32)
    v1    = 1.0 + 0.1 * jax.random.uniform(keys[5], (Cmid,), jnp.float32)
    g2    = 1.0 + 0.05 * jax.random.normal(keys[6], (Cout,), jnp.float32)
    beta2 = 0.05 * jax.random.normal(keys[7], (Cout,), jnp.float32)
    m2    = 0.1 * jax.random.normal(keys[8], (Cout,), jnp.float32)
    v2    = 1.0 + 0.1 * jax.random.uniform(keys[9], (Cout,), jnp.float32)

    x = jax.random.normal(keys[10], (N, Cin, H, W), jnp.float32)

    w1f, b1f = fold_bn_into_conv(w1_hwio, g1, beta1, m1, v1, eps)
    w2f, b2f = fold_bn_into_conv(w2_hwio, g2, beta2, m2, v2, eps)
    params = dict(w1=w1f, b1=b1f, w2=w2f, b2=b2f)

    out = jax.block_until_ready(down_forward(x, params))
    assert out.shape == (N, Cout, H // 2, W // 2), out.shape

    raw = dict(w1=w1_hwio, g1=g1, beta1=beta1, m1=m1, v1=v1,
               w2=w2_hwio, g2=g2, beta2=beta2, m2=m2, v2=v2, eps=eps)
    ref = jax.block_until_ready(down_reference(x, raw))
    max_err = float(jnp.max(jnp.abs(out - ref)))
    assert jnp.allclose(out, ref, atol=2e-4, rtol=2e-4), max_err

    print("KERNEL_OK")
</pallas_src>

<mosaic_0001>
module attributes {stable_mosaic.version = 11 : i64} {
  func.func @_down_fused_kernel(%arg0: i32, %arg1: memref<1x16x16x4xf32, #tpu.memory_space<vmem>>, %arg2: memref<9x4x8xf32, #tpu.memory_space<vmem>>, %arg3: memref<1x8xf32, #tpu.memory_space<vmem>>, %arg4: memref<9x8x8xf32, #tpu.memory_space<vmem>>, %arg5: memref<1x8xf32, #tpu.memory_space<vmem>>, %arg6: memref<1x8x8x8xf32, #tpu.memory_space<vmem>>, %arg7: memref<10x10x4xf32, #tpu.memory_space<vmem>>, %arg8: memref<10x10x8xf32, #tpu.memory_space<vmem>>) attributes {dimension_semantics = [#tpu.dimension_semantics<parallel>], iteration_bounds = array<i64: 2>, scalar_prefetch = 0 : i64, scratch_operands = 2 : i64, tpu.core_type = #tpu.core_type<tc>, window_params = [{transform_indices = @transform_0, window_bounds = array<i64: 1, 16, 16, 4>}, {pipeline_mode = #tpu.pipeline_mode<synchronous>, transform_indices = @transform_1, window_bounds = array<i64: 9, 4, 8>}, {pipeline_mode = #tpu.pipeline_mode<synchronous>, transform_indices = @transform_2, window_bounds = array<i64: 1, 8>}, {pipeline_mode = #tpu.pipeline_mode<synchronous>, transform_indices = @transform_3, window_bounds = array<i64: 9, 8, 8>}, {pipeline_mode = #tpu.pipeline_mode<synchronous>, transform_indices = @transform_4, window_bounds = array<i64: 1, 8>}, {transform_indices = @transform_5, window_bounds = array<i64: 1, 8, 8, 8>}]} {
    %c0 = arith.constant 0 : index
    %c0_0 = arith.constant 0 : index
    %c0_1 = arith.constant 0 : index
    %c0_2 = arith.constant 0 : index
    %0 = vector.load %arg1[%c0, %c0_0, %c0_1, %c0_2] : memref<1x16x16x4xf32, #tpu.memory_space<vmem>>, vector<1x16x16x4xf32>
    %1 = vector.shape_cast %0 : vector<1x16x16x4xf32> to vector<16x16x4xf32>
    %2 = vector.shape_cast %1 : vector<16x16x4xf32> to vector<8x2x16x4xf32>
    %3 = vector.extract_strided_slice %2 {offsets = [0, 0, 0, 0], sizes = [8, 1, 16, 4], strides = [1, 1, 1, 1]} : vector<8x2x16x4xf32> to vector<8x1x16x4xf32>
    %4 = vector.shape_cast %3 : vector<8x1x16x4xf32> to vector<8x16x4xf32>
    %5 = vector.extract_strided_slice %2 {offsets = [0, 1, 0, 0], sizes = [8, 1, 16, 4], strides = [1, 1, 1, 1]} : vector<8x2x16x4xf32> to vector<8x1x16x4xf32>
    %6 = vector.shape_cast %5 : vector<8x1x16x4xf32> to vector<8x16x4xf32>
    %7 = arith.maximumf %4, %6 : vector<8x16x4xf32>
    %8 = vector.shape_cast %7 : vector<8x16x4xf32> to vector<8x8x2x4xf32>
    %9 = vector.extract_strided_slice %8 {offsets = [0, 0, 0, 0], sizes = [8, 8, 1, 4], strides = [1, 1, 1, 1]} : vector<8x8x2x4xf32> to vector<8x8x1x4xf32>
    %10 = vector.shape_cast %9 : vector<8x8x1x4xf32> to vector<8x8x4xf32>
    %11 = vector.extract_strided_slice %8 {offsets = [0, 0, 1, 0], sizes = [8, 8, 1, 4], strides = [1, 1, 1, 1]} : vector<8x8x2x4xf32> to vector<8x8x1x4xf32>
    %12 = vector.shape_cast %11 : vector<8x8x1x4xf32> to vector<8x8x4xf32>
    %13 = arith.maximumf %10, %12 : vector<8x8x4xf32>
    %cst = arith.constant 0.000000e+00 : f32
    %14 = vector.broadcast %cst : f32 to vector<10x10x4xf32>
    %c0_3 = arith.constant 0 : index
    %c0_4 = arith.constant 0 : index
    %c0_5 = arith.constant 0 : index
    %15 = vector.load %arg7[%c0_3, %c0_4, %c0_5] : memref<10x10x4xf32, #tpu.memory_space<vmem>>, vector<10x10x4xf32>
    tpu.vector_store %arg7[%c0_3, %c0_4, %c0_5], %14 {strides = array<i32>} : memref<10x10x4xf32, #tpu.memory_space<vmem>>, vector<10x10x4xf32>,
    %c1 = arith.constant 1 : index
    %c1_6 = arith.constant 1 : index
    %c0_7 = arith.constant 0 : index
    %16 = vector.load %arg7[%c1, %c1_6, %c0_7] : memref<10x10x4xf32, #tpu.memory_space<vmem>>, vector<8x8x4xf32>
    tpu.vector_store %arg7[%c1, %c1_6, %c0_7], %13 {strides = array<i32>} : memref<10x10x4xf32, #tpu.memory_space<vmem>>, vector<8x8x4xf32>,
    %cst_8 = arith.constant 0.000000e+00 : f32
    %17 = vector.broadcast %cst_8 : f32 to vector<64x8xf32>
    %c0_9 = arith.constant 0 : index
    %c0_10 = arith.constant 0 : index
    %c0_11 = arith.constant 0 : index
    %18 = vector.load %arg7[%c0_9, %c0_10, %c0_11] : memref<10x10x4xf32, #tpu.memory_space<vmem>>, vector<8x8x4xf32>
    %19 = vector.shape_cast %18 : vector<8x8x4xf32> to vector<64x4xf32>
    %c0_12 = arith.constant 0 : index
    %c0_13 = arith.constant 0 : index
    %c0_14 = arith.constant 0 : index
    %20 = vector.load %arg2[%c0_12, %c0_13, %c0_14] : memref<9x4x8xf32, #tpu.memory_space<vmem>>, vector<1x4x8xf32>
    %21 = vector.shape_cast %20 : vector<1x4x8xf32> to vector<4x8xf32>
    %cst_15 = arith.constant dense<0.000000e+00> : vector<64x8xf32>
    %22 = tpu.matmul %19, %21, %cst_15 {dimension_numbers = #tpu.dot_dimension_numbers<[1], [0], [0], [1], [0, 0, 1, 1], [], []>} : vector<64x4xf32>, vector<4x8xf32>, vector<64x8xf32> -> vector<64x8xf32>
    %23 = arith.addf %17, %22 : vector<64x8xf32>
    %c0_16 = arith.constant 0 : index
    %c1_17 = arith.constant 1 : index
    %c0_18 = arith.constant 0 : index
    %24 = vector.load %arg7[%c0_16, %c1_17, %c0_18] : memref<10x10x4xf32, #tpu.memory_space<vmem>>, vector<8x8x4xf32>
    %25 = vector.shape_cast %24 : vector<8x8x4xf32> to vector<64x4xf32>
    %c1_19 = arith.constant 1 : index
    %c0_20 = arith.constant 0 : index
    %c0_21 = arith.constant 0 : index
    %26 = vector.load %arg2[%c1_19, %c0_20, %c0_21] : memref<9x4x8xf32, #tpu.memory_space<vmem>>, vector<1x4x8xf32>
    %27 = vector.shape_cast %26 : vector<1x4x8xf32> to vector<4x8xf32>
    %cst_22 = arith.constant dense<0.000000e+00> : vector<64x8xf32>
    %28 = tpu.matmul %25, %27, %cst_22 {dimension_numbers = #tpu.dot_dimension_numbers<[1], [0], [0], [1], [0, 0, 1, 1], [], []>} : vector<64x4xf32>, vector<4x8xf32>, vector<64x8xf32> -> vector<64x8xf32>
    %29 = arith.addf %23, %28 : vector<64x8xf32>
    %c0_23 = arith.constant 0 : index
    %c2 = arith.constant 2 : index
    %c0_24 = arith.constant 0 : index
    %30 = vector.load %arg7[%c0_23, %c2, %c0_24] : memref<10x10x4xf32, #tpu.memory_space<vmem>>, vector<8x8x4xf32>
    %31 = vector.shape_cast %30 : vector<8x8x4xf32> to vector<64x4xf32>
    %c2_25 = arith.constant 2 : index
    %c0_26 = arith.constant 0 : index
    %c0_27 = arith.constant 0 : index
    %32 = vector.load %arg2[%c2_25, %c0_26, %c0_27] : memref<9x4x8xf32, #tpu.memory_space<vmem>>, vector<1x4x8xf32>
    %33 = vector.shape_cast %32 : vector<1x4x8xf32> to vector<4x8xf32>
    %cst_28 = arith.constant dense<0.000000e+00> : vector<64x8xf32>
    %34 = tpu.matmul %31, %33, %cst_28 {dimension_numbers = #tpu.dot_dimension_numbers<[1], [0], [0], [1], [0, 0, 1, 1], [], []>} : vector<64x4xf32>, vector<4x8xf32>, vector<64x8xf32> -> vector<64x8xf32>
    %35 = arith.addf %29, %34 : vector<64x8xf32>
    %c1_29 = arith.constant 1 : index
    %c0_30 = arith.constant 0 : index
    %c0_31 = arith.constant 0 : index
    %36 = vector.load %arg7[%c1_29, %c0_30, %c0_31] : memref<10x10x4xf32, #tpu.memory_space<vmem>>, vector<8x8x4xf32>
    %37 = vector.shape_cast %36 : vector<8x8x4xf32> to vector<64x4xf32>
    %c3 = arith.constant 3 : index
    %c0_32 = arith.constant 0 : index
    %c0_33 = arith.constant 0 : index
    %38 = vector.load %arg2[%c3, %c0_32, %c0_33] : memref<9x4x8xf32, #tpu.memory_space<vmem>>, vector<1x4x8xf32>
    %39 = vector.shape_cast %38 : vector<1x4x8xf32> to vector<4x8xf32>
    %cst_34 = arith.constant dense<0.000000e+00> : vector<64x8xf32>
    %40 = tpu.matmul %37, %39, %cst_34 {dimension_numbers = #tpu.dot_dimension_numbers<[1], [0], [0], [1], [0, 0, 1, 1], [], []>} : vector<64x4xf32>, vector<4x8xf32>, vector<64x8xf32> -> vector<64x8xf32>
    %41 = arith.addf %35, %40 : vector<64x8xf32>
    %c1_35 = arith.constant 1 : index
    %c1_36 = arith.constant 1 : index
    %c0_37 = arith.constant 0 : index
    %42 = vector.load %arg7[%c1_35, %c1_36, %c0_37] : memref<10x10x4xf32, #tpu.memory_space<vmem>>, vector<8x8x4xf32>
    %43 = vector.shape_cast %42 : vector<8x8x4xf32> to vector<64x4xf32>
    %c4 = arith.constant 4 : index
    %c0_38 = arith.constant 0 : index
    %c0_39 = arith.constant 0 : index
    %44 = vector.load %arg2[%c4, %c0_38, %c0_39] : memref<9x4x8xf32, #tpu.memory_space<vmem>>, vector<1x4x8xf32>
    %45 = vector.shape_cast %44 : vector<1x4x8xf32> to vector<4x8xf32>
    %cst_40 = arith.constant dense<0.000000e+00> : vector<64x8xf32>
    %46 = tpu.matmul %43, %45, %cst_40 {dimension_numbers = #tpu.dot_dimension_numbers<[1], [0], [0], [1], [0, 0, 1, 1], [], []>} : vector<64x4xf32>, vector<4x8xf32>, vector<64x8xf32> -> vector<64x8xf32>
    %47 = arith.addf %41, %46 : vector<64x8xf32>
    %c1_41 = arith.constant 1 : index
    %c2_42 = arith.constant 2 : index
    %c0_43 = arith.constant 0 : index
    %48 = vector.load %arg7[%c1_41, %c2_42, %c0_43] : memref<10x10x4xf32, #tpu.memory_space<vmem>>, vector<8x8x4xf32>
    %49 = vector.shape_cast %48 : vector<8x8x4xf32> to vector<64x4xf32>
    %c5 = arith.constant 5 : index
    %c0_44 = arith.constant 0 : index
    %c0_45 = arith.constant 0 : index
    %50 = vector.load %arg2[%c5, %c0_44, %c0_45] : memref<9x4x8xf32, #tpu.memory_space<vmem>>, vector<1x4x8xf32>
    %51 = vector.shape_cast %50 : vector<1x4x8xf32> to vector<4x8xf32>
    %cst_46 = arith.constant dense<0.000000e+00> : vector<64x8xf32>
    %52 = tpu.matmul %49, %51, %cst_46 {dimension_numbers = #tpu.dot_dimension_numbers<[1], [0], [0], [1], [0, 0, 1, 1], [], []>} : vector<64x4xf32>, vector<4x8xf32>, vector<64x8xf32> -> vector<64x8xf32>
    %53 = arith.addf %47, %52 : vector<64x8xf32>
    %c2_47 = arith.constant 2 : index
    %c0_48 = arith.constant 0 : index
    %c0_49 = arith.constant 0 : index
    %54 = vector.load %arg7[%c2_47, %c0_48, %c0_49] : memref<10x10x4xf32, #tpu.memory_space<vmem>>, vector<8x8x4xf32>
    %55 = vector.shape_cast %54 : vector<8x8x4xf32> to vector<64x4xf32>
    %c6 = arith.constant 6 : index
    %c0_50 = arith.constant 0 : index
    %c0_51 = arith.constant 0 : index
    %56 = vector.load %arg2[%c6, %c0_50, %c0_51] : memref<9x4x8xf32, #tpu.memory_space<vmem>>, vector<1x4x8xf32>
    %57 = vector.shape_cast %56 : vector<1x4x8xf32> to vector<4x8xf32>
    %cst_52 = arith.constant dense<0.000000e+00> : vector<64x8xf32>
    %58 = tpu.matmul %55, %57, %cst_52 {dimension_numbers = #tpu.dot_dimension_numbers<[1], [0], [0], [1], [0, 0, 1, 1], [], []>} : vector<64x4xf32>, vector<4x8xf32>, vector<64x8xf32> -> vector<64x8xf32>
    %59 = arith.addf %53, %58 : vector<64x8xf32>
    %c2_53 = arith.constant 2 : index
    %c1_54 = arith.constant 1 : index
    %c0_55 = arith.constant 0 : index
    %60 = vector.load %arg7[%c2_53, %c1_54, %c0_55] : memref<10x10x4xf32, #tpu.memory_space<vmem>>, vector<8x8x4xf32>
    %61 = vector.shape_cast %60 : vector<8x8x4xf32> to vector<64x4xf32>
    %c7 = arith.constant 7 : index
    %c0_56 = arith.constant 0 : index
    %c0_57 = arith.constant 0 : index
    %62 = vector.load %arg2[%c7, %c0_56, %c0_57] : memref<9x4x8xf32, #tpu.memory_space<vmem>>, vector<1x4x8xf32>
    %63 = vector.shape_cast %62 : vector<1x4x8xf32> to vector<4x8xf32>
    %cst_58 = arith.constant dense<0.000000e+00> : vector<64x8xf32>
    %64 = tpu.matmul %61, %63, %cst_58 {dimension_numbers = #tpu.dot_dimension_numbers<[1], [0], [0], [1], [0, 0, 1, 1], [], []>} : vector<64x4xf32>, vector<4x8xf32>, vector<64x8xf32> -> vector<64x8xf32>
    %65 = arith.addf %59, %64 : vector<64x8xf32>
    %c2_59 = arith.constant 2 : index
    %c2_60 = arith.constant 2 : index
    %c0_61 = arith.constant 0 : index
    %66 = vector.load %arg7[%c2_59, %c2_60, %c0_61] : memref<10x10x4xf32, #tpu.memory_space<vmem>>, vector<8x8x4xf32>
    %67 = vector.shape_cast %66 : vector<8x8x4xf32> to vector<64x4xf32>
    %c8 = arith.constant 8 : index
    %c0_62 = arith.constant 0 : index
    %c0_63 = arith.constant 0 : index
    %68 = vector.load %arg2[%c8, %c0_62, %c0_63] : memref<9x4x8xf32, #tpu.memory_space<vmem>>, vector<1x4x8xf32>
    %69 = vector.shape_cast %68 : vector<1x4x8xf32> to vector<4x8xf32>
    %cst_64 = arith.constant dense<0.000000e+00> : vector<64x8xf32>
    %70 = tpu.matmul %67, %69, %cst_64 {dimension_numbers = #tpu.dot_dimension_numbers<[1], [0], [0], [1], [0, 0, 1, 1], [], []>} : vector<64x4xf32>, vector<4x8xf32>, vector<64x8xf32> -> vector<64x8xf32>
    %71 = arith.addf %65, %70 : vector<64x8xf32>
    %c0_65 = arith.constant 0 : index
    %c0_66 = arith.constant 0 : index
    %72 = vector.load %arg3[%c0_65, %c0_66] : memref<1x8xf32, #tpu.memory_space<vmem>>, vector<1x8xf32>
    %73 = vector.broadcast %72 : vector<1x8xf32> to vector<64x8xf32>
    %74 = arith.addf %71, %73 : vector<64x8xf32>
    %cst_67 = arith.constant 0.000000e+00 : f32
    %75 = vector.broadcast %cst_67 : f32 to vector<64x8xf32>
    %76 = arith.maximumf %74, %75 : vector<64x8xf32>
    %cst_68 = arith.constant 0.000000e+00 : f32
    %77 = vector.broadcast %cst_68 : f32 to vector<10x10x8xf32>
    %c0_69 = arith.constant 0 : index
    %c0_70 = arith.constant 0 : index
    %c0_71 = arith.constant 0 : index
    %78 = vector.load %arg8[%c0_69, %c0_70, %c0_71] : memref<10x10x8xf32, #tpu.memory_space<vmem>>, vector<10x10x8xf32>
    tpu.vector_store %arg8[%c0_69, %c0_70, %c0_71], %77 {strides = array<i32>} : memref<10x10x8xf32, #tpu.memory_space<vmem>>, vector<10x10x8xf32>,
    %79 = vector.shape_cast %76 : vector<64x8xf32> to vector<8x8x8xf32>
    %c1_72 = arith.constant 1 : index
    %c1_73 = arith.constant 1 : index
    %c0_74 = arith.constant 0 : index
    %80 = vector.load %arg8[%c1_72, %c1_73, %c0_74] : memref<10x10x8xf32, #tpu.memory_space<vmem>>, vector<8x8x8xf32>
    tpu.vector_store %arg8[%c1_72, %c1_73, %c0_74], %79 {strides = array<i32>} : memref<10x10x8xf32, #tpu.memory_space<vmem>>, vector<8x8x8xf32>,
    %cst_75 = arith.constant 0.000000e+00 : f32
    %81 = vector.broadcast %cst_75 : f32 to vector<64x8xf32>
    %c0_76 = arith.constant 0 : index
    %c0_77 = arith.constant 0 : index
    %c0_78 = arith.constant 0 : index
    %82 = vector.load %arg8[%c0_76, %c0_77, %c0_78] : memref<10x10x8xf32, #tpu.memory_space<vmem>>, vector<8x8x8xf32>
    %83 = vector.shape_cast %82 : vector<8x8x8xf32> to vector<64x8xf32>
    %c0_79 = arith.constant 0 : index
    %c0_80 = arith.constant 0 : index
    %c0_81 = arith.constant 0 : index
    %84 = vector.load %arg4[%c0_79, %c0_80, %c0_81] : memref<9x8x8xf32, #tpu.memory_space<vmem>>, vector<1x8x8xf32>
    %85 = vector.shape_cast %84 : vector<1x8x8xf32> to vector<8x8xf32>
    %cst_82 = arith.constant dense<0.000000e+00> : vector<64x8xf32>
    %86 = tpu.matmul %83, %85, %cst_82 {dimension_numbers = #tpu.dot_dimension_numbers<[1], [0], [0], [1], [0, 0, 1, 1], [], []>} : vector<64x8xf32>, vector<8x8xf32>, vector<64x8xf32> -> vector<64x8xf32>
    %87 = arith.addf %81, %86 : vector<64x8xf32>
    %c0_83 = arith.constant 0 : index
    %c1_84 = arith.constant 1 : index
    %c0_85 = arith.constant 0 : index
    %88 = vector.load %arg8[%c0_83, %c1_84, %c0_85] : memref<10x10x8xf32, #tpu.memory_space<vmem>>, vector<8x8x8xf32>
    %89 = vector.shape_cast %88 : vector<8x8x8xf32> to vector<64x8xf32>
    %c1_86 = arith.constant 1 : index
    %c0_87 = arith.constant 0 : index
    %c0_88 = arith.constant 0 : index
    %90 = vector.load %arg4[%c1_86, %c0_87, %c0_88] : memref<9x8x8xf32, #tpu.memory_space<vmem>>, vector<1x8x8xf32>
    %91 = vector.shape_cast %90 : vector<1x8x8xf32> to vector<8x8xf32>
    %cst_89 = arith.constant dense<0.000000e+00> : vector<64x8xf32>
    %92 = tpu.matmul %89, %91, %cst_89 {dimension_numbers = #tpu.dot_dimension_numbers<[1], [0], [0], [1], [0, 0, 1, 1], [], []>} : vector<64x8xf32>, vector<8x8xf32>, vector<64x8xf32> -> vector<64x8xf32>
    %93 = arith.addf %87, %92 : vector<64x8xf32>
    %c0_90 = arith.constant 0 : index
    %c2_91 = arith.constant 2 : index
    %c0_92 = arith.constant 0 : index
    %94 = vector.load %arg8[%c0_90, %c2_91, %c0_92] : memref<10x10x8xf32, #tpu.memory_space<vmem>>, vector<8x8x8xf32>
    %95 = vector.shape_cast %94 : vector<8x8x8xf32> to vector<64x8xf32>
    %c2_93 = arith.constant 2 : index
    %c0_94 = arith.constant 0 : index
    %c0_95 = arith.constant 0 : index
    %96 = vector.load %arg4[%c2_93, %c0_94, %c0_95] : memref<9x8x8xf32, #tpu.memory_space<vmem>>, vector<1x8x8xf32>
    %97 = vector.shape_cast %96 : vector<1x8x8xf32> to vector<8x8xf32>
    %cst_96 = arith.constant dense<0.000000e+00> : vector<64x8xf32>
    %98 = tpu.matmul %95, %97, %cst_96 {dimension_numbers = #tpu.dot_dimension_numbers<[1], [0], [0], [1], [0, 0, 1, 1], [], []>} : vector<64x8xf32>, vector<8x8xf32>, vector<64x8xf32> -> vector<64x8xf32>
    %99 = arith.addf %93, %98 : vector<64x8xf32>
    %c1_97 = arith.constant 1 : index
    %c0_98 = arith.constant 0 : index
    %c0_99 = arith.constant 0 : index
    %100 = vector.load %arg8[%c1_97, %c0_98, %c0_99] : memref<10x10x8xf32, #tpu.memory_space<vmem>>, vector<8x8x8xf32>
    %101 = vector.shape_cast %100 : vector<8x8x8xf32> to vector<64x8xf32>
    %c3_100 = arith.constant 3 : index
    %c0_101 = arith.constant 0 : index
    %c0_102 = arith.constant 0 : index
    %102 = vector.load %arg4[%c3_100, %c0_101, %c0_102] : memref<9x8x8xf32, #tpu.memory_space<vmem>>, vector<1x8x8xf32>
    %103 = vector.shape_cast %102 : vector<1x8x8xf32> to vector<8x8xf32>
    %cst_103 = arith.constant dense<0.000000e+00> : vector<64x8xf32>
    %104 = tpu.matmul %101, %103, %cst_103 {dimension_numbers = #tpu.dot_dimension_numbers<[1], [0], [0], [1], [0, 0, 1, 1], [], []>} : vector<64x8xf32>, vector<8x8xf32>, vector<64x8xf32> -> vector<64x8xf32>
    %105 = arith.addf %99, %104 : vector<64x8xf32>
    %c1_104 = arith.constant 1 : index
    %c1_105 = arith.constant 1 : index
    %c0_106 = arith.constant 0 : index
    %106 = vector.load %arg8[%c1_104, %c1_105, %c0_106] : memref<10x10x8xf32, #tpu.memory_space<vmem>>, vector<8x8x8xf32>
    %107 = vector.shape_cast %106 : vector<8x8x8xf32> to vector<64x8xf32>
    %c4_107 = arith.constant 4 : index
    %c0_108 = arith.constant 0 : index
    %c0_109 = arith.constant 0 : index
    %108 = vector.load %arg4[%c4_107, %c0_108, %c0_109] : memref<9x8x8xf32, #tpu.memory_space<vmem>>, vector<1x8x8xf32>
    %109 = vector.shape_cast %108 : vector<1x8x8xf32> to vector<8x8xf32>
    %cst_110 = arith.constant dense<0.000000e+00> : vector<64x8xf32>
    %110 = tpu.matmul %107, %109, %cst_110 {dimension_numbers = #tpu.dot_dimension_numbers<[1], [0], [0], [1], [0, 0, 1, 1], [], []>} : vector<64x8xf32>, vector<8x8xf32>, vector<64x8xf32> -> vector<64x8xf32>
    %111 = arith.addf %105, %110 : vector<64x8xf32>
    %c1_111 = arith.constant 1 : index
    %c2_112 = arith.constant 2 : index
    %c0_113 = arith.constant 0 : index
    %112 = vector.load %arg8[%c1_111, %c2_112, %c0_113] : memref<10x10x8xf32, #tpu.memory_space<vmem>>, vector<8x8x8xf32>
    %113 = vector.shape_cast %112 : vector<8x8x8xf32> to vector<64x8xf32>
    %c5_114 = arith.constant 5 : index
    %c0_115 = arith.constant 0 : index
    %c0_116 = arith.constant 0 : index
    %114 = vector.load %arg4[%c5_114, %c0_115, %c0_116] : memref<9x8x8xf32, #tpu.memory_space<vmem>>, vector<1x8x8xf32>
    %115 = vector.shape_cast %114 : vector<1x8x8xf32> to vector<8x8xf32>
    %cst_117 = arith.constant dense<0.000000e+00> : vector<64x8xf32>
    %116 = tpu.matmul %113, %115, %cst_117 {dimension_numbers = #tpu.dot_dimension_numbers<[1], [0], [0], [1], [0, 0, 1, 1], [], []>} : vector<64x8xf32>, vector<8x8xf32>, vector<64x8xf32> -> vector<64x8xf32>
    %117 = arith.addf %111, %116 : vector<64x8xf32>
    %c2_118 = arith.constant 2 : index
    %c0_119 = arith.constant 0 : index
    %c0_120 = arith.constant 0 : index
    %118 = vector.load %arg8[%c2_118, %c0_119, %c0_120] : memref<10x10x8xf32, #tpu.memory_space<vmem>>, vector<8x8x8xf32>
    %119 = vector.shape_cast %118 : vector<8x8x8xf32> to vector<64x8xf32>
    %c6_121 = arith.constant 6 : index
    %c0_122 = arith.constant 0 : index
    %c0_123 = arith.constant 0 : index
    %120 = vector.load %arg4[%c6_121, %c0_122, %c0_123] : memref<9x8x8xf32, #tpu.memory_space<vmem>>, vector<1x8x8xf32>
    %121 = vector.shape_cast %120 : vector<1x8x8xf32> to vector<8x8xf32>
    %cst_124 = arith.constant dense<0.000000e+00> : vector<64x8xf32>
    %122 = tpu.matmul %119, %121, %cst_124 {dimension_numbers = #tpu.dot_dimension_numbers<[1], [0], [0], [1], [0, 0, 1, 1], [], []>} : vector<64x8xf32>, vector<8x8xf32>, vector<64x8xf32> -> vector<64x8xf32>
    %123 = arith.addf %117, %122 : vector<64x8xf32>
    %c2_125 = arith.constant 2 : index
    %c1_126 = arith.constant 1 : index
    %c0_127 = arith.constant 0 : index
    %124 = vector.load %arg8[%c2_125, %c1_126, %c0_127] : memref<10x10x8xf32, #tpu.memory_space<vmem>>, vector<8x8x8xf32>
    %125 = vector.shape_cast %124 : vector<8x8x8xf32> to vector<64x8xf32>
    %c7_128 = arith.constant 7 : index
    %c0_129 = arith.constant 0 : index
    %c0_130 = arith.constant 0 : index
    %126 = vector.load %arg4[%c7_128, %c0_129, %c0_130] : memref<9x8x8xf32, #tpu.memory_space<vmem>>, vector<1x8x8xf32>
    %127 = vector.shape_cast %126 : vector<1x8x8xf32> to vector<8x8xf32>
    %cst_131 = arith.constant dense<0.000000e+00> : vector<64x8xf32>
    %128 = tpu.matmul %125, %127, %cst_131 {dimension_numbers = #tpu.dot_dimension_numbers<[1], [0], [0], [1], [0, 0, 1, 1], [], []>} : vector<64x8xf32>, vector<8x8xf32>, vector<64x8xf32> -> vector<64x8xf32>
    %129 = arith.addf %123, %128 : vector<64x8xf32>
    %c2_132 = arith.constant 2 : index
    %c2_133 = arith.constant 2 : index
    %c0_134 = arith.constant 0 : index
    %130 = vector.load %arg8[%c2_132, %c2_133, %c0_134] : memref<10x10x8xf32, #tpu.memory_space<vmem>>, vector<8x8x8xf32>
    %131 = vector.shape_cast %130 : vector<8x8x8xf32> to vector<64x8xf32>
    %c8_135 = arith.constant 8 : index
    %c0_136 = arith.constant 0 : index
    %c0_137 = arith.constant 0 : index
    %132 = vector.load %arg4[%c8_135, %c0_136, %c0_137] : memref<9x8x8xf32, #tpu.memory_space<vmem>>, vector<1x8x8xf32>
    %133 = vector.shape_cast %132 : vector<1x8x8xf32> to vector<8x8xf32>
    %cst_138 = arith.constant dense<0.000000e+00> : vector<64x8xf32>
    %134 = tpu.matmul %131, %133, %cst_138 {dimension_numbers = #tpu.dot_dimension_numbers<[1], [0], [0], [1], [0, 0, 1, 1], [], []>} : vector<64x8xf32>, vector<8x8xf32>, vector<64x8xf32> -> vector<64x8xf32>
    %135 = arith.addf %129, %134 : vector<64x8xf32>
    %c0_139 = arith.constant 0 : index
    %c0_140 = arith.constant 0 : index
    %136 = vector.load %arg5[%c0_139, %c0_140] : memref<1x8xf32, #tpu.memory_space<vmem>>, vector<1x8xf32>
    %137 = vector.broadcast %136 : vector<1x8xf32> to vector<64x8xf32>
    %138 = arith.addf %135, %137 : vector<64x8xf32>
    %cst_141 = arith.constant 0.000000e+00 : f32
    %139 = vector.broadcast %cst_141 : f32 to vector<64x8xf32>
    %140 = arith.maximumf %138, %139 : vector<64x8xf32>
    %141 = vector.shape_cast %140 : vector<64x8xf32> to vector<1x8x8x8xf32>
    %c0_142 = arith.constant 0 : index
    %c0_143 = arith.constant 0 : index
    %c0_144 = arith.constant 0 : index
    %c0_145 = arith.constant 0 : index
    %142 = vector.load %arg6[%c0_142, %c0_143, %c0_144, %c0_145] : memref<1x8x8x8xf32, #tpu.memory_space<vmem>>, vector<1x8x8x8xf32>
    tpu.vector_store %arg6[%c0_142, %c0_143, %c0_144, %c0_145], %141 {strides = array<i32>} : memref<1x8x8x8xf32, #tpu.memory_space<vmem>>, vector<1x8x8x8xf32>,
    return
  }
  func.func @transform_0(%arg0: i32) -> (i32, i32, i32, i32) {
    %c0_i32 = arith.constant 0 : i32
    %c0_i32_0 = arith.constant 0 : i32
    %c0_i32_1 = arith.constant 0 : i32
    %c0_i32_2 = arith.constant 0 : i32
    return %arg0, %c0_i32, %c0_i32_0, %c0_i32_1 : i32, i32, i32, i32
  }
  func.func @transform_1(%arg0: i32) -> (i32, i32, i32) {
    %c0_i32 = arith.constant 0 : i32
    %c0_i32_0 = arith.constant 0 : i32
    %c0_i32_1 = arith.constant 0 : i32
    %c0_i32_2 = arith.constant 0 : i32
    return %c0_i32, %c0_i32_0, %c0_i32_1 : i32, i32, i32
  }
  func.func @transform_2(%arg0: i32) -> (i32, i32) {
    %c0_i32 = arith.constant 0 : i32
    %c0_i32_0 = arith.constant 0 : i32
    %c0_i32_1 = arith.constant 0 : i32
    return %c0_i32, %c0_i32_0 : i32, i32
  }
  func.func @transform_3(%arg0: i32) -> (i32, i32, i32) {
    %c0_i32 = arith.constant 0 : i32
    %c0_i32_0 = arith.constant 0 : i32
    %c0_i32_1 = arith.constant 0 : i32
    %c0_i32_2 = arith.constant 0 : i32
    return %c0_i32, %c0_i32_0, %c0_i32_1 : i32, i32, i32
  }
  func.func @transform_4(%arg0: i32) -> (i32, i32) {
    %c0_i32 = arith.constant 0 : i32
    %c0_i32_0 = arith.constant 0 : i32
    %c0_i32_1 = arith.constant 0 : i32
    return %c0_i32, %c0_i32_0 : i32, i32
  }
  func.func @transform_5(%arg0: i32) -> (i32, i32, i32, i32) {
    %c0_i32 = arith.constant 0 : i32
    %c0_i32_0 = arith.constant 0 : i32
    %c0_i32_1 = arith.constant 0 : i32
    %c0_i32_2 = arith.constant 0 : i32
    return %arg0, %c0_i32, %c0_i32_0, %c0_i32_1 : i32, i32, i32, i32
  }
}

</mosaic_0001>

<llo_original>
// kernel: down_forward.1
$region0: #{down_forward.1}
  #allocation0 [shape = 'u32[]', space=smem, size = 0x4, offset = 0x4, fixed_abs, tag = 'smem constant byte address 0x4 - core index']
  #allocation1 [shape = 'u32[72,128]{1,0:T(1,128)}', space=vmem, size = 0x9000, scoped, tag = 'internal scratch']
  #allocation2 [shape = 'f32[10,10,4]{2,1,0:T(8,128)}', space=vmem, size = 0x14000, scoped, tag = 'scratch operand']
  #allocation3 [shape = 'f32[10,10,8]{2,1,0:T(8,128)}', space=vmem, size = 0x14000, scoped, tag = 'scratch operand']
  %s0 = inlined_call_operand.vmem [shape: f32[2,16,16,4], index: 0, kind: input, shape index: {}]
  %s1 = inlined_call_operand.vmem [shape: f32[9,4,8], index: 1, kind: input, shape index: {}]
  %s2 = inlined_call_operand.vmem [shape: f32[1,8], index: 2, kind: input, shape index: {}]
  %s3 = inlined_call_operand.vmem [shape: f32[9,8,8], index: 3, kind: input, shape index: {}]
  %s4 = inlined_call_operand.vmem [shape: f32[1,8], index: 4, kind: input, shape index: {}]
  %s5 = inlined_call_operand.vmem [shape: f32[2,8,8,8], index: 5, kind: output, shape index: {}]
  %s6 = sld [smem:[#allocation0]]
  $region53: #{down_forward.1} parent=0
    _
  %s8 = ssub.s32 1, %s6
  %s9 = scalar_select 0, %s8, %s6
  loop: start=0, step=1, limit=4
  $region2: #{down_forward.1} parent=0 // loop_pre_header
    _
  $region3: #{down_forward.1} parent=0 // loop_header
    %s11 = sphi 0, %s15
    %p12 = scmp.ge.s32.totalorder %s11, 4
    %s21 = sphi 0, %s23
    %s24 = sphi 0, %s21
    %s25 = sphi 0, %s24
    %s41 = sphi 0, %s25
    %s45 = sphi 0, %s45
    %s47 = sphi 0, %s45
    %s48 = sphi 0, %s47
    %s62 = sphi 0, %s48
    %s66 = sphi 0, %s66
    %s68 = sphi 0, %s66
    %s69 = sphi 0, %s68
    %s83 = sphi 0, %s69
    %s87 = sphi 0, %s87
    %s89 = sphi 0, %s87
    %s90 = sphi 0, %s89
    %s104 = sphi 0, %s90
    %s108 = sphi 0, %s108
    %s110 = sphi 0, %s108
    %s111 = sphi 0, %s110
    %s125 = sphi 0, %s111
    %s131 = sphi 0, %s133
    %s134 = sphi 0, %s131
    %s135 = sphi 0, %s134
    %s151 = sphi 0, %s135
  $region4: #{down_forward.1} parent=0 // loop_header_branch
    %14 = sbr.rel (%p12) target = $region8
  $region5: #{down_forward.1} parent=0 // loop_body
    %s16 = ssub.s32 %s11, 1
    %s17 = ssub.s32 %s11, 2
    %s18 = sadd.s32 %s11, 1
    %s19 = ssub.s32 %s11, %s18
    %p20 = scmp.eq.s32.totalorder %s19, 0
    %s22 = sadd.s32 %s21, 1
    %s23 = scalar_select %p20, %s21, %s22
    %p26 = pneg %p20
    %p27 = scmp.eq.s32.totalorder %s11, 1
    %p28 = por %p26, %p27
    %p29 = scmp.ne.s32.totalorder %s21, %s24
    %p30 = scmp.eq.s32.totalorder %s11, 0
    %p31 = por %p29, %p30
    %p32 = scmp.ne.s32.totalorder %s21, %s24
    %p33 = scmp.eq.s32.totalorder %s16, 1
    %p34 = por %p32, %p33
    %p35 = scmp.ne.s32.totalorder %s24, %s25
    %p36 = scmp.eq.s32.totalorder %s16, 0
    %p37 = por %p35, %p36
    %p38 = scmp.ne.s32.totalorder %s24, %s25
    %p39 = scmp.eq.s32.totalorder %s17, 1
    %p40 = por %p38, %p39
    %p42 = scmp.ne.s32.totalorder %s25, %s41
    %p43 = scmp.eq.s32.totalorder %s17, 0
    %p44 = por %p42, %p43
    %s46 = sadd.s32 %s45, 1
    %p49 = scmp.eq.s32.totalorder %s11, 1
    %p50 = scmp.ne.s32.totalorder %s45, %s47
    %p51 = scmp.eq.s32.totalorder %s11, 0
    %p52 = por %p50, %p51
    %p53 = scmp.ne.s32.totalorder %s45, %s47
    %p54 = scmp.eq.s32.totalorder %s16, 1
    %p55 = por %p53, %p54
    %p56 = scmp.ne.s32.totalorder %s47, %s48
    %p57 = scmp.eq.s32.totalorder %s16, 0
    %p58 = por %p56, %p57
    %p59 = scmp.ne.s32.totalorder %s47, %s48
    %p60 = scmp.eq.s32.totalorder %s17, 1
    %p61 = por %p59, %p60
    %p63 = scmp.ne.s32.totalorder %s48, %s62
    %p64 = scmp.eq.s32.totalorder %s17, 0
    %p65 = por %p63, %p64
    %s67 = sadd.s32 %s66, 1
    %p70 = scmp.eq.s32.totalorder %s11, 1
    %p71 = scmp.ne.s32.totalorder %s66, %s68
    %p72 = scmp.eq.s32.totalorder %s11, 0
    %p73 = por %p71, %p72
    %p74 = scmp.ne.s32.totalorder %s66, %s68
    %p75 = scmp.eq.s32.totalorder %s16, 1
    %p76 = por %p74, %p75
    %p77 = scmp.ne.s32.totalorder %s68, %s69
    %p78 = scmp.eq.s32.totalorder %s16, 0
    %p79 = por %p77, %p78
    %p80 = scmp.ne.s32.totalorder %s68, %s69
    %p81 = scmp.eq.s32.totalorder %s17, 1
    %p82 = por %p80, %p81
    %p84 = scmp.ne.s32.totalorder %s69, %s83
    %p85 = scmp.eq.s32.totalorder %s17, 0
    %p86 = por %p84, %p85
    %s88 = sadd.s32 %s87, 1
    %p91 = scmp.eq.s32.totalorder %s11, 1
    %p92 = scmp.ne.s32.totalorder %s87, %s89
    %p93 = scmp.eq.s32.totalorder %s11, 0
    %p94 = por %p92, %p93
    %p95 = scmp.ne.s32.totalorder %s87, %s89
    %p96 = scmp.eq.s32.totalorder %s16, 1
    %p97 = por %p95, %p96
    %p98 = scmp.ne.s32.totalorder %s89, %s90
    %p99 = scmp.eq.s32.totalorder %s16, 0
    %p100 = por %p98, %p99
    %p101 = scmp.ne.s32.totalorder %s89, %s90
    %p102 = scmp.eq.s32.totalorder %s17, 1
    %p103 = por %p101, %p102
    %p105 = scmp.ne.s32.totalorder %s90, %s104
    %p106 = scmp.eq.s32.totalorder %s17, 0
    %p107 = por %p105, %p106
    %s109 = sadd.s32 %s108, 1
    %p112 = scmp.eq.s32.totalorder %s11, 1
    %p113 = scmp.ne.s32.totalorder %s108, %s110
    %p114 = scmp.eq.s32.totalorder %s11, 0
    %p115 = por %p113, %p114
    %p116 = scmp.ne.s32.totalorder %s108, %s110
    %p117 = scmp.eq.s32.totalorder %s16, 1
    %p118 = por %p116, %p117
    %p119 = scmp.ne.s32.totalorder %s110, %s111
    %p120 = scmp.eq.s32.totalorder %s16, 0
    %p121 = por %p119, %p120
    %p122 = scmp.ne.s32.totalorder %s110, %s111
    %p123 = scmp.eq.s32.totalorder %s17, 1
    %p124 = por %p122, %p123
    %p126 = scmp.ne.s32.totalorder %s111, %s125
    %p127 = scmp.eq.s32.totalorder %s17, 0
    %p128 = por %p126, %p127
    %s129 = ssub.s32 %s11, %s18
    %p130 = scmp.eq.s32.totalorder %s129, 0
    %s132 = sadd.s32 %s131, 1
    %s133 = scalar_select %p130, %s131, %s132
    %p136 = pneg %p130
    %p137 = scmp.eq.s32.totalorder %s11, 1
    %p138 = por %p136, %p137
    %p139 = scmp.ne.s32.totalorder %s131, %s134
    %p140 = scmp.eq.s32.totalorder %s11, 0
    %p141 = por %p139, %p140
    %p142 = scmp.ne.s32.totalorder %s131, %s134
    %p143 = scmp.eq.s32.totalorder %s16, 1
    %p144 = por %p142, %p143
    %p145 = scmp.ne.s32.totalorder %s134, %s135
    %p146 = scmp.eq.s32.totalorder %s16, 0
    %p147 = por %p145, %p146
    %p148 = scmp.ne.s32.totalorder %s134, %s135
    %p149 = scmp.eq.s32.totalorder %s17, 1
    %p150 = por %p148, %p149
    %p152 = scmp.ne.s32.totalorder %s135, %s151
    %p153 = scmp.eq.s32.totalorder %s17, 0
    %p154 = por %p152, %p153
    %p155 = scmp.le.s32.totalorder 1, %s11
    %p156 = scmp.lt.s32.totalorder %s11, 3
    %p157 = pnand %p155, %p156
    %p158 = pneg %p157
    // Predicated region
    $region9: #{down_forward.1} parent=5 // pred_check
      _
    $region10: #{down_forward.1} parent=5 // pred_check_branch
      %160 = sbr.rel (%p157) target = $region12
    $region11: #{down_forward.1} parent=5 // pred_region
      %s161 = ssub.s32 %s11, 1
      // Predicated region
      $region13: #{down_forward.1} parent=11 // pred_check
        %p162 = pneg %p58
      $region14: #{down_forward.1} parent=11 // pred_check_branch
        %164 = sbr.rel (%p162) target = $region16
      $region15: #{down_forward.1} parent=11 // pred_region
        _
      $region16: #{down_forward.1} parent=11 // pred_fallthru
        _
      // Predicated region
      $region17: #{down_forward.1} parent=11 // pred_check
        %p165 = pneg %p79
      $region18: #{down_forward.1} parent=11 // pred_check_branch
        %167 = sbr.rel (%p165) target = $region20
      $region19: #{down_forward.1} parent=11 // pred_region
        _
      $region20: #{down_forward.1} parent=11 // pred_fallthru
        _
      // Predicated region
      $region21: #{down_forward.1} parent=11 // pred_check
        %p168 = pneg %p100
      $region22: #{down_forward.1} parent=11 // pred_check_branch
        %170 = sbr.rel (%p168) target = $region24
      $region23: #{down_forward.1} parent=11 // pred_region
        _
      $region24: #{down_forward.1} parent=11 // pred_fallthru
        _
      // Predicated region
      $region25: #{down_forward.1} parent=11 // pred_check
        %p171 = pneg %p121
      $region26: #{down_forward.1} parent=11 // pred_check_branch
        %173 = sbr.rel (%p171) target = $region28
      $region27: #{down_forward.1} parent=11 // pred_region
        _
      $region28: #{down_forward.1} parent=11 // pred_fallthru
        _
    $region12: #{down_forward.1} parent=5 // pred_fallthru
      _
    %p174 = scmp.lt.s32.totalorder %s11, 2
    // Predicated region
    $region29: #{down_forward.1} parent=5 // pred_check
      %p175 = pneg %p174
    $region30: #{down_forward.1} parent=5 // pred_check_branch
      %177 = sbr.rel (%p175) target = $region32
    $region31: #{down_forward.1} parent=5 // pred_region
      // Predicated region
      $region33: #{down_forward.1} parent=31 // pred_check
        %p178 = pneg %p31
      $region34: #{down_forward.1} parent=31 // pred_check_branch
        %180 = sbr.rel (%p178) target = $region36
      $region35: #{down_forward.1} parent=31 // pred_region
        %p181 = scmp.lt.s32.totalorder %s11, 1
        %s182 = scalar_select %p181, %s11, 1
        %s183 = smul.addr %s182, 32
        %s184 = smul.addr %s183, 8
        %s185 = scalar_lea.vmem %s0, %s184
      $region36: #{down_forward.1} parent=31 // pred_fallthru
        _
    $region32: #{down_forward.1} parent=5 // pred_fallthru
      _
    %p186 = scmp.le.s32.totalorder 1, %s11
    %p187 = scmp.lt.s32.totalorder %s11, 3
    %p188 = pnand %p186, %p187
    %p189 = pneg %p188
    // Predicated region
    $region37: #{down_forward.1} parent=5 // pred_check
      _
    $region38: #{down_forward.1} parent=5 // pred_check_branch
      %191 = sbr.rel (%p188) target = $region40
    $region39: #{down_forward.1} parent=5 // pred_region
      %s192 = ssub.s32 %s11, 1
      %p193 = scmp.lt.s32.totalorder %s16, 1
      %s194 = scalar_select %p193, %s16, 1
      %s195 = smul.addr %s194, 32
      %s196 = smul.addr %s195, 8
      %s197 = scalar_lea.vmem %s0, %s196
      %p198 = pneg %p37
      %p199 = pneg %p34
      %p200 = pneg %p58
      %p201 = pneg %p55
      %p202 = pneg %p79
      %p203 = pneg %p76
      %p204 = pneg %p100
      %p205 = pneg %p97
      %p206 = pneg %p121
      %p207 = pneg %p118
      %p208 = pneg %p147
      %p209 = pneg %p144
      %p210 = scmp.lt.s32.totalorder %s16, 1
      %s211 = scalar_select %p210, %s16, 1
      %s212 = smul.addr %s211, 8
      %s213 = smul.addr %s212, 8
      %s214 = scalar_lea.vmem %s5, %s213
      %p215 = scmp.lt.s32.totalorder %s16, 1
      %s216 = scalar_select %p215, %s16, 1
      %s217 = smul.addr %s216, 32
      %s218 = smul.addr %s217, 8
      %s219 = scalar_lea.vmem %s0, %s218
      %p220 = scmp.lt.s32.totalorder %s16, 1
      %s221 = scalar_select %p220, %s16, 1
      %s222 = smul.addr %s221, 8
      %s223 = smul.addr %s222, 8
      %s224 = scalar_lea.vmem %s5, %s223
      %v225 = vld [vmem:[%s219] sm:$0xff]
      %v226 = vld [vmem:[%s219 + $0x8] sm:$0xff]
      %v227 = vld [vmem:[%s219 + $0x10] sm:$0xff]
      %v228 = vld [vmem:[%s219 + $0x18] sm:$0xff]
      %v229 = vld [vmem:[%s219 + $0x20] sm:$0xff]
      %v230 = vld [vmem:[%s219 + $0x28] sm:$0xff]
      %v231 = vld [vmem:[%s219 + $0x30] sm:$0xff]
      %v232 = vld [vmem:[%s219 + $0x38] sm:$0xff]
      %v233 = vld [vmem:[%s219 + $0x40] sm:$0xff]
      %v234 = vld [vmem:[%s219 + $0x48] sm:$0xff]
      %v235 = vld [vmem:[%s219 + $0x50] sm:$0xff]
      %v236 = vld [vmem:[%s219 + $0x58] sm:$0xff]
      %v237 = vld [vmem:[%s219 + $0x60] sm:$0xff]
      %v238 = vld [vmem:[%s219 + $0x68] sm:$0xff]
      %v239 = vld [vmem:[%s219 + $0x70] sm:$0xff]
      %v240 = vld [vmem:[%s219 + $0x78] sm:$0xff]
      %v241 = vld [vmem:[%s219 + $0x80] sm:$0xff]
      %v242 = vld [vmem:[%s219 + $0x88] sm:$0xff]
      %v243 = vld [vmem:[%s219 + $0x90] sm:$0xff]
      %v244 = vld [vmem:[%s219 + $0x98] sm:$0xff]
      %v245 = vld [vmem:[%s219 + $0xa0] sm:$0xff]
      %v246 = vld [vmem:[%s219 + $0xa8] sm:$0xff]
      %v247 = vld [vmem:[%s219 + $0xb0] sm:$0xff]
      %v248 = vld [vmem:[%s219 + $0xb8] sm:$0xff]
      %v249 = vld [vmem:[%s219 + $0xc0] sm:$0xff]
      %v250 = vld [vmem:[%s219 + $0xc8] sm:$0xff]
      %v251 = vld [vmem:[%s219 + $0xd0] sm:$0xff]
      %v252 = vld [vmem:[%s219 + $0xd8] sm:$0xff]
      %v253 = vld [vmem:[%s219 + $0xe0] sm:$0xff]
      %v254 = vld [vmem:[%s219 + $0xe8] sm:$0xff]
      %v255 = vld [vmem:[%s219 + $0xf0] sm:$0xff]
      %v256 = vld [vmem:[%s219 + $0xf8] sm:$0xff]
      %v257 = vmax.f32 %v225, %v227
      %v258 = vmax.f32 %v226, %v228
      %v259 = vmax.f32 %v229, %v231
      %v260 = vmax.f32 %v230, %v232
      %v261 = vmax.f32 %v233, %v235
      %v262 = vmax.f32 %v234, %v236
      %v263 = vmax.f32 %v237, %v239
      %v264 = vmax.f32 %v238, %v240
      %v265 = vmax.f32 %v241, %v243
      %v266 = vmax.f32 %v242, %v244
      %v267 = vmax.f32 %v245, %v247
      %v268 = vmax.f32 %v246, %v248
      %v269 = vmax.f32 %v249, %v251
      %v270 = vmax.f32 %v250, %v252
      %v271 = vmax.f32 %v253, %v255
      %v272 = vmax.f32 %v254, %v256
      %v289 = vrot.slane %v257, 2
      %v290 = vrot.slane %v257, 4
      %v291 = vrot.slane %v257, 6
      %v292 = vrot.slane %v258, 2
      %v293 = vrot.slane %v258, 4
      %v294 = vrot.slane %v258, 6
      %v295 = vrot.slane %v259, 2
      %v296 = vrot.slane %v259, 4
      %v297 = vrot.slane %v259, 6
      %v298 = vrot.slane %v260, 2
      %v299 = vrot.slane %v260, 4
      %v300 = vrot.slane %v260, 6
      %v301 = vrot.slane %v261, 2
      %v302 = vrot.slane %v261, 4
      %v303 = vrot.slane %v261, 6
      %v304 = vrot.slane %v262, 2
      %v305 = vrot.slane %v262, 4
      %v306 = vrot.slane %v262, 6
      %v307 = vrot.slane %v263, 2
      %v308 = vrot.slane %v263, 4
      %v309 = vrot.slane %v263, 6
      %v310 = vrot.slane %v264, 2
      %v311 = vrot.slane %v264, 4
      %v312 = vrot.slane %v264, 6
      %v313 = vrot.slane %v265, 2
      %v314 = vrot.slane %v265, 4
      %v315 = vrot.slane %v265, 6
      %v316 = vrot.slane %v266, 2
      %v317 = vrot.slane %v266, 4
      %v318 = vrot.slane %v266, 6
      %v319 = vrot.slane %v267, 2
      %v320 = vrot.slane %v267, 4
      %v321 = vrot.slane %v267, 6
      %v322 = vrot.slane %v268, 2
      %v323 = vrot.slane %v268, 4
      %v324 = vrot.slane %v268, 6
      %v325 = vrot.slane %v269, 2
      %v326 = vrot.slane %v269, 4
      %v327 = vrot.slane %v269, 6
      %v328 = vrot.slane %v270, 2
      %v329 = vrot.slane %v270, 4
      %v330 = vrot.slane %v270, 6
      %v331 = vrot.slane %v271, 2
      %v332 = vrot.slane %v271, 4
      %v333 = vrot.slane %v271, 6
      %v334 = vrot.slane %v272, 2
      %v335 = vrot.slane %v272, 4
      %v336 = vrot.slane %v272, 6
      %v385 = vrot.slane %v257, 7
      %v386 = vrot.slane %v385, 2
      %v387 = vrot.slane %v289, 7
      %v388 = vrot.slane %v387, 2
      %v389 = vrot.slane %v290, 7
      %v390 = vrot.slane %v389, 2
      %v391 = vrot.slane %v291, 7
      %v392 = vrot.slane %v391, 2
      %v393 = vrot.slane %v258, 7
      %v394 = vrot.slane %v393, 2
      %v395 = vrot.slane %v292, 7
      %v396 = vrot.slane %v395, 2
      %v397 = vrot.slane %v293, 7
      %v398 = vrot.slane %v397, 2
      %v399 = vrot.slane %v294, 7
      %v400 = vrot.slane %v399, 2
      %v401 = vrot.slane %v259, 7
      %v402 = vrot.slane %v401, 2
      %v403 = vrot.slane %v295, 7
      %v404 = vrot.slane %v403, 2
      %v405 = vrot.slane %v296, 7
      %v406 = vrot.slane %v405, 2
      %v407 = vrot.slane %v297, 7
      %v408 = vrot.slane %v407, 2
      %v409 = vrot.slane %v260, 7
      %v410 = vrot.slane %v409, 2
      %v411 = vrot.slane %v298, 7
      %v412 = vrot.slane %v411, 2
      %v413 = vrot.slane %v299, 7
      %v414 = vrot.slane %v413, 2
      %v415 = vrot.slane %v300, 7
      %v416 = vrot.slane %v415, 2
      %v417 = vrot.slane %v261, 7
      %v418 = vrot.slane %v417, 2
      %v419 = vrot.slane %v301, 7
      %v420 = vrot.slane %v419, 2
      %v421 = vrot.slane %v302, 7
      %v422 = vrot.slane %v421, 2
      %v423 = vrot.slane %v303, 7
      %v424 = vrot.slane %v423, 2
      %v425 = vrot.slane %v262, 7
      %v426 = vrot.slane %v425, 2
      %v427 = vrot.slane %v304, 7
      %v428 = vrot.slane %v427, 2
      %v429 = vrot.slane %v305, 7
      %v430 = vrot.slane %v429, 2
      %v431 = vrot.slane %v306, 7
      %v432 = vrot.slane %v431, 2
      %v433 = vrot.slane %v263, 7
      %v434 = vrot.slane %v433, 2
      %v435 = vrot.slane %v307, 7
      %v436 = vrot.slane %v435, 2
      %v437 = vrot.slane %v308, 7
      %v438 = vrot.slane %v437, 2
      %v439 = vrot.slane %v309, 7
      %v440 = vrot.slane %v439, 2
      %v441 = vrot.slane %v264, 7
      %v442 = vrot.slane %v441, 2
      %v443 = vrot.slane %v310, 7
      %v444 = vrot.slane %v443, 2
      %v445 = vrot.slane %v311, 7
      %v446 = vrot.slane %v445, 2
      %v447 = vrot.slane %v312, 7
      %v448 = vrot.slane %v447, 2
      %v449 = vrot.slane %v265, 7
      %v450 = vrot.slane %v449, 2
      %v451 = vrot.slane %v313, 7
      %v452 = vrot.slane %v451, 2
      %v453 = vrot.slane %v314, 7
      %v454 = vrot.slane %v453, 2
      %v455 = vrot.slane %v315, 7
      %v456 = vrot.slane %v455, 2
      %v457 = vrot.slane %v266, 7
      %v458 = vrot.slane %v457, 2
      %v459 = vrot.slane %v316, 7
      %v460 = vrot.slane %v459, 2
      %v461 = vrot.slane %v317, 7
      %v462 = vrot.slane %v461, 2
      %v463 = vrot.slane %v318, 7
      %v464 = vrot.slane %v463, 2
      %v465 = vrot.slane %v267, 7
      %v466 = vrot.slane %v465, 2
      %v467 = vrot.slane %v319, 7
      %v468 = vrot.slane %v467, 2
      %v469 = vrot.slane %v320, 7
      %v470 = vrot.slane %v469, 2
      %v471 = vrot.slane %v321, 7
      %v472 = vrot.slane %v471, 2
      %v473 = vrot.slane %v268, 7
      %v474 = vrot.slane %v473, 2
      %v475 = vrot.slane %v322, 7
      %v476 = vrot.slane %v475, 2
      %v477 = vrot.slane %v323, 7
      %v478 = vrot.slane %v477, 2
      %v479 = vrot.slane %v324, 7
      %v480 = vrot.slane %v479, 2
      %v481 = vrot.slane %v269, 7
      %v482 = vrot.slane %v481, 2
      %v483 = vrot.slane %v325, 7
      %v484 = vrot.slane %v483, 2
      %v485 = vrot.slane %v326, 7
      %v486 = vrot.slane %v485, 2
      %v487 = vrot.slane %v327, 7
      %v488 = vrot.slane %v487, 2
      %v489 = vrot.slane %v270, 7
      %v490 = vrot.slane %v489, 2
      %v491 = vrot.slane %v328, 7
      %v492 = vrot.slane %v491, 2
      %v493 = vrot.slane %v329, 7
      %v494 = vrot.slane %v493, 2
      %v495 = vrot.slane %v330, 7
      %v496 = vrot.slane %v495, 2
      %v497 = vrot.slane %v271, 7
      %v498 = vrot.slane %v497, 2
      %v499 = vrot.slane %v331, 7
      %v500 = vrot.slane %v499, 2
      %v501 = vrot.slane %v332, 7
      %v502 = vrot.slane %v501, 2
      %v503 = vrot.slane %v333, 7
      %v504 = vrot.slane %v503, 2
      %v505 = vrot.slane %v272, 7
      %v506 = vrot.slane %v505, 2
      %v507 = vrot.slane %v334, 7
      %v508 = vrot.slane %v507, 2
      %v509 = vrot.slane %v335, 7
      %v510 = vrot.slane %v509, 2
      %v511 = vrot.slane %v336, 7
      %v512 = vrot.slane %v511, 2
      %v577 = vmax.f32 %v257, %v386
      %v578 = vmax.f32 %v289, %v388
      %v579 = vmax.f32 %v290, %v390
      %v580 = vmax.f32 %v291, %v392
      %v581 = vmax.f32 %v258, %v394
      %v582 = vmax.f32 %v292, %v396
      %v583 = vmax.f32 %v293, %v398
      %v584 = vmax.f32 %v294, %v400
      %v585 = vmax.f32 %v259, %v402
      %v586 = vmax.f32 %v295, %v404
      %v587 = vmax.f32 %v296, %v406
      %v588 = vmax.f32 %v297, %v408
      %v589 = vmax.f32 %v260, %v410
      %v590 = vmax.f32 %v298, %v412
      %v591 = vmax.f32 %v299, %v414
      %v592 = vmax.f32 %v300, %v416
      %v593 = vmax.f32 %v261, %v418
      %v594 = vmax.f32 %v301, %v420
      %v595 = vmax.f32 %v302, %v422
      %v596 = vmax.f32 %v303, %v424
      %v597 = vmax.f32 %v262, %v426
      %v598 = vmax.f32 %v304, %v428
      %v599 = vmax.f32 %v305, %v430
      %v600 = vmax.f32 %v306, %v432
      %v601 = vmax.f32 %v263, %v434
      %v602 = vmax.f32 %v307, %v436
      %v603 = vmax.f32 %v308, %v438
      %v604 = vmax.f32 %v309, %v440
      %v605 = vmax.f32 %v264, %v442
      %v606 = vmax.f32 %v310, %v444
      %v607 = vmax.f32 %v311, %v446
      %v608 = vmax.f32 %v312, %v448
      %v609 = vmax.f32 %v265, %v450
      %v610 = vmax.f32 %v313, %v452
      %v611 = vmax.f32 %v314, %v454
      %v612 = vmax.f32 %v315, %v456
      %v613 = vmax.f32 %v266, %v458
      %v614 = vmax.f32 %v316, %v460
      %v615 = vmax.f32 %v317, %v462
      %v616 = vmax.f32 %v318, %v464
      %v617 = vmax.f32 %v267, %v466
      %v618 = vmax.f32 %v319, %v468
      %v619 = vmax.f32 %v320, %v470
      %v620 = vmax.f32 %v321, %v472
      %v621 = vmax.f32 %v268, %v474
      %v622 = vmax.f32 %v322, %v476
      %v623 = vmax.f32 %v323, %v478
      %v624 = vmax.f32 %v324, %v480
      %v625 = vmax.f32 %v269, %v482
      %v626 = vmax.f32 %v325, %v484
      %v627 = vmax.f32 %v326, %v486
      %v628 = vmax.f32 %v327, %v488
      %v629 = vmax.f32 %v270, %v490
      %v630 = vmax.f32 %v328, %v492
      %v631 = vmax.f32 %v329, %v494
      %v632 = vmax.f32 %v330, %v496
      %v633 = vmax.f32 %v271, %v498
      %v634 = vmax.f32 %v331, %v500
      %v635 = vmax.f32 %v332, %v502
      %v636 = vmax.f32 %v333, %v504
      %v637 = vmax.f32 %v272, %v506
      %v638 = vmax.f32 %v334, %v508
      %v639 = vmax.f32 %v335, %v510
      %v640 = vmax.f32 %v336, %v512
      %vm641 = vcmask 31744
      %642 = vst.msk [vmem:[#allocation2] sm:$0xff] %vm641, 0.0
      %vm643 = vcmask 25600
      %644 = vst.msk [vmem:[#allocation2 + $0x8] sm:$0x3] %vm643, 0.0
      %645 = vst.msk [vmem:[#allocation2 + $0x10] sm:$0xff] %vm641, 0.0
      %646 = vst.msk [vmem:[#allocation2 + $0x18] sm:$0x3] %vm643, 0.0
      %647 = vst.msk [vmem:[#allocation2 + $0x20] sm:$0xff] %vm641, 0.0
      %648 = vst.msk [vmem:[#allocation2 + $0x28] sm:$0x3] %vm643, 0.0
      %649 = vst.msk [vmem:[#allocation2 + $0x30] sm:$0xff] %vm641, 0.0
      %650 = vst.msk [vmem:[#allocation2 + $0x38] sm:$0x3] %vm643, 0.0
      %651 = vst.msk [vmem:[#allocation2 + $0x40] sm:$0xff] %vm641, 0.0
      %652 = vst.msk [vmem:[#allocation2 + $0x48] sm:$0x3] %vm643, 0.0
      %653 = vst.msk [vmem:[#allocation2 + $0x50] sm:$0xff] %vm641, 0.0
      %654 = vst.msk [vmem:[#allocation2 + $0x58] sm:$0x3] %vm643, 0.0
      %655 = vst.msk [vmem:[#allocation2 + $0x60] sm:$0xff] %vm641, 0.0
      %656 = vst.msk [vmem:[#allocation2 + $0x68] sm:$0x3] %vm643, 0.0
      %657 = vst.msk [vmem:[#allocation2 + $0x70] sm:$0xff] %vm641, 0.0
      %658 = vst.msk [vmem:[#allocation2 + $0x78] sm:$0x3] %vm643, 0.0
      %659 = vst.msk [vmem:[#allocation2 + $0x80] sm:$0xff] %vm641, 0.0
      %660 = vst.msk [vmem:[#allocation2 + $0x88] sm:$0x3] %vm643, 0.0
      %661 = vst.msk [vmem:[#allocation2 + $0x90] sm:$0xff] %vm641, 0.0
      %662 = vst.msk [vmem:[#allocation2 + $0x98] sm:$0x3] %vm643, 0.0
      %v727 = vperm.slane %v577, 0
      %v728 = vperm.slane %v578, 0
      %v729 = vperm.slane %v579, 0
      %v730 = vperm.slane %v580, 0
      %v731 = vperm.slane %v581, 0
      %v732 = vperm.slane %v582, 0
      %v733 = vperm.slane %v583, 0
      %v734 = vperm.slane %v584, 0
      %v735 = vperm.slane %v585, 0
      %v736 = vperm.slane %v586, 0
      %v737 = vperm.slane %v587, 0
      %v738 = vperm.slane %v588, 0
      %v739 = vperm.slane %v589, 0
      %v740 = vperm.slane %v590, 0
      %v741 = vperm.slane %v591, 0
      %v742 = vperm.slane %v592, 0
      %v743 = vperm.slane %v593, 0
      %v744 = vperm.slane %v594, 0
      %v745 = vperm.slane %v595, 0
      %v746 = vperm.slane %v596, 0
      %v747 = vperm.slane %v597, 0
      %v748 = vperm.slane %v598, 0
      %v749 = vperm.slane %v599, 0
      %v750 = vperm.slane %v600, 0
      %v751 = vperm.slane %v601, 0
      %v752 = vperm.slane %v602, 0
      %v753 = vperm.slane %v603, 0
      %v754 = vperm.slane %v604, 0
      %v755 = vperm.slane %v605, 0
      %v756 = vperm.slane %v606, 0
      %v757 = vperm.slane %v607, 0
      %v758 = vperm.slane %v608, 0
      %v759 = vperm.slane %v609, 0
      %v760 = vperm.slane %v610, 0
      %v761 = vperm.slane %v611, 0
      %v762 = vperm.slane %v612, 0
      %v763 = vperm.slane %v613, 0
      %v764 = vperm.slane %v614, 0
      %v765 = vperm.slane %v615, 0
      %v766 = vperm.slane %v616, 0
      %v767 = vperm.slane %v617, 0
      %v768 = vperm.slane %v618, 0
      %v769 = vperm.slane %v619, 0
      %v770 = vperm.slane %v620, 0
      %v771 = vperm.slane %v621, 0
      %v772 = vperm.slane %v622, 0
      %v773 = vperm.slane %v623, 0
      %v774 = vperm.slane %v624, 0
      %v775 = vperm.slane %v625, 0
      %v776 = vperm.slane %v626, 0
      %v777 = vperm.slane %v627, 0
      %v778 = vperm.slane %v628, 0
      %v779 = vperm.slane %v629, 0
      %v780 = vperm.slane %v630, 0
      %v781 = vperm.slane %v631, 0
      %v782 = vperm.slane %v632, 0
      %v783 = vperm.slane %v633, 0
      %v784 = vperm.slane %v634, 0
      %v785 = vperm.slane %v635, 0
      %v786 = vperm.slane %v636, 0
      %v787 = vperm.slane %v637, 0
      %v788 = vperm.slane %v638, 0
      %v789 = vperm.slane %v639, 0
      %v790 = vperm.slane %v640, 0
      %vm791 = vcmask 1041409
      %v792 = vsel %vm791, %v728, %v727
      %vm793 = vcmask 1042434
      %v794 = vsel %vm793, %v729, %v792
      %vm795 = vcmask 1043459
      %v796 = vsel %vm795, %v730, %v794
      %vm797 = vcmask 1044484
      %v798 = vsel %vm797, %v731, %v796
      %vm799 = vcmask 1045509
      %v800 = vsel %vm799, %v732, %v798
      %vm801 = vcmask 1046534
      %v802 = vsel %vm801, %v733, %v800
      %vm803 = vcmask 1047559
      %v804 = vsel %vm803, %v734, %v802
      %v805 = vsel %vm791, %v736, %v735
      %v806 = vsel %vm793, %v737, %v805
      %v807 = vsel %vm795, %v738, %v806
      %v808 = vsel %vm797, %v739, %v807
      %v809 = vsel %vm799, %v740, %v808
      %v810 = vsel %vm801, %v741, %v809
      %v811 = vsel %vm803, %v742, %v810
      %v812 = vsel %vm791, %v744, %v743
      %v813 = vsel %vm793, %v745, %v812
      %v814 = vsel %vm795, %v746, %v813
      %v815 = vsel %vm797, %v747, %v814
      %v816 = vsel %vm799, %v748, %v815
      %v817 = vsel %vm801, %v749, %v816
      %v818 = vsel %vm803, %v750, %v817
      %v819 = vsel %vm791, %v752, %v751
      %v820 = vsel %vm793, %v753, %v819
      %v821 = vsel %vm795, %v754, %v820
      %v822 = vsel %vm797, %v755, %v821
      %v823 = vsel %vm799, %v756, %v822
      %v824 = vsel %vm801, %v757, %v823
      %v825 = vsel %vm803, %v758, %v824
      %v826 = vsel %vm791, %v760, %v759
      %v827 = vsel %vm793, %v761, %v826
      %v828 = vsel %vm795, %v762, %v827
      %v829 = vsel %vm797, %v763, %v828
      %v830 = vsel %vm799, %v764, %v829
      %v831 = vsel %vm801, %v765, %v830
      %v832 = vsel %vm803, %v766, %v831
      %v833 = vsel %vm791, %v768, %v767
      %v834 = vsel %vm793, %v769, %v833
      %v835 = vsel %vm795, %v770, %v834
      %v836 = vsel %vm797, %v771, %v835
      %v837 = vsel %vm799, %v772, %v836
      %v838 = vsel %vm801, %v773, %v837
      %v839 = vsel %vm803, %v774, %v838
      %v840 = vsel %vm791, %v776, %v775
      %v841 = vsel %vm793, %v777, %v840
      %v842 = vsel %vm795, %v778, %v841
      %v843 = vsel %vm797, %v779, %v842
      %v844 = vsel %vm799, %v780, %v843
      %v845 = vsel %vm801, %v781, %v844
      %v846 = vsel %vm803, %v782, %v845
      %v847 = vsel %vm791, %v784, %v783
      %v848 = vsel %vm793, %v785, %v847
      %v849 = vsel %vm795, %v786, %v848
      %v850 = vsel %vm797, %v787, %v849
      %v851 = vsel %vm799, %v788, %v850
      %v852 = vsel %vm801, %v789, %v851
      %v853 = vsel %vm803, %v790, %v852
      %s862 = scalar_lea.vmem [#allocation2], 16
      %863 = vst.msk [vmem:[%s862 + $0x1] sm:$0xff] %vm641, %v804
      %864 = vst.msk [vmem:[%s862 + $0x11] sm:$0xff] %vm641, %v811
      %865 = vst.msk [vmem:[%s862 + $0x21] sm:$0xff] %vm641, %v818
      %866 = vst.msk [vmem:[%s862 + $0x31] sm:$0xff] %vm641, %v825
      %867 = vst.msk [vmem:[%s862 + $0x41] sm:$0xff] %vm641, %v832
      %868 = vst.msk [vmem:[%s862 + $0x51] sm:$0xff] %vm641, %v839
      %869 = vst.msk [vmem:[%s862 + $0x61] sm:$0xff] %vm641, %v846
      %870 = vst.msk [vmem:[%s862 + $0x71] sm:$0xff] %vm641, %v853
      %v871 = vld [vmem:[#allocation2] sm:$0xff]
      %v872 = vld [vmem:[#allocation2 + $0x10] sm:$0xff]
      %v873 = vld [vmem:[#allocation2 + $0x20] sm:$0xff]
      %v874 = vld [vmem:[#allocation2 + $0x30] sm:$0xff]
      %v875 = vld [vmem:[#allocation2 + $0x40] sm:$0xff]
      %v876 = vld [vmem:[#allocation2 + $0x50] sm:$0xff]
      %v877 = vld [vmem:[#allocation2 + $0x60] sm:$0xff]
      %v878 = vld [vmem:[#allocation2 + $0x70] sm:$0xff]
      %v879 = vld [vmem:[%s1] sm:$0xf]
      %v880 = vld [vmem:[#allocation2 + $0x1] sm:$0xff]
      %v881 = vld [vmem:[#allocation2 + $0x11] sm:$0xff]
      %v882 = vld [vmem:[#allocation2 + $0x21] sm:$0xff]
      %v883 = vld [vmem:[#allocation2 + $0x31] sm:$0xff]
      %v884 = vld [vmem:[#allocation2 + $0x41] sm:$0xff]
      %v885 = vld [vmem:[#allocation2 + $0x51] sm:$0xff]
      %v886 = vld [vmem:[#allocation2 + $0x61] sm:$0xff]
      %v887 = vld [vmem:[#allocation2 + $0x71] sm:$0xff]
      %s888 = scalar_lea.vmem %s1, 4
      %v889 = vld [vmem:[%s888] sm:$0xf]
      %v891 = vsel %vm641, %v880, 0
      %v894 = vsel %vm641, %v881, 0
      %v897 = vsel %vm641, %v882, 0
      %v900 = vsel %vm641, %v883, 0
      %v903 = vsel %vm641, %v884, 0
      %v906 = vsel %vm641, %v885, 0
      %v909 = vsel %vm641, %v886, 0
      %v912 = vsel %vm641, %v887, 0
      %vm914 = vcmask 1043456
      %v916 = vsel %vm914, %v889, 0
      %918 = vmatpush.msra.mxu0 0.0
      %919 = vmatpush.msra.mxu0 0.0
      %920 = vmatpush.msra.mxu0 0.0
      %921 = vmatpush.msra.mxu0 0.0
      %922 = vmatpush.msra.mxu0 0.0
      %923 = vmatpush.msra.mxu0 0.0
      %924 = vmatpush.msra.mxu0 0.0
      %925 = vmatpush.msra.mxu0 0.0
      %926 = vmatpush.msra.mxu0 0.0
      %927 = vmatpush.msra.mxu0 0.0
      %928 = vmatpush.msra.mxu0 0.0
      %929 = vmatpush.msra.mxu0 0.0
      %930 = vmatpush.msra.mxu0 0.0
      %931 = vmatpush.msra.mxu0 0.0
      %932 = vmatpush.msra.mxu0 0.0
      %933 = vmatpush.msra.mxu0 %v916
      %934 = vmatmul.f32.gmra.mxu0 %v891
      %v935 = vpop.f32.mrf.mxu0
      %v936 = vadd.f32 0.0, %v935
      %937 = vmatmul.f32.gmra.mxu0 %v894
      %v938 = vpop.f32.mrf.mxu0
      %v939 = vadd.f32 0.0, %v938
      %940 = vmatmul.f32.gmra.mxu0 %v897
      %v941 = vpop.f32.mrf.mxu0
      %v942 = vadd.f32 0.0, %v941
      %943 = vmatmul.f32.gmra.mxu0 %v900
      %v944 = vpop.f32.mrf.mxu0
      %v945 = vadd.f32 0.0, %v944
      %946 = vmatmul.f32.gmra.mxu0 %v903
      %v947 = vpop.f32.mrf.mxu0
      %v948 = vadd.f32 0.0, %v947
      %949 = vmatmul.f32.gmra.mxu0 %v906
      %v950 = vpop.f32.mrf.mxu0
      %v951 = vadd.f32 0.0, %v950
      %952 = vmatmul.f32.gmra.mxu0 %v909
      %v953 = vpop.f32.mrf.mxu0
      %v954 = vadd.f32 0.0, %v953
      %955 = vmatmul.f32.gmra.mxu0 %v912
      %v956 = vpop.f32.mrf.mxu0
      %v957 = vadd.f32 0.0, %v956
      %958 = vdwg.mxu0
      %v960 = vsel %vm641, %v871, 0
      %v963 = vsel %vm641, %v872, 0
      %v966 = vsel %vm641, %v873, 0
      %v969 = vsel %vm641, %v874, 0
      %v972 = vsel %vm641, %v875, 0
      %v975 = vsel %vm641, %v876, 0
      %v978 = vsel %vm641, %v877, 0
      %v981 = vsel %vm641, %v878, 0
      %v984 = vsel %vm914, %v879, 0
      %986 = vmatpush.msra.mxu0 0.0
      %987 = vmatpush.msra.mxu0 0.0
      %988 = vmatpush.msra.mxu0 0.0
      %989 = vmatpush.msra.mxu0 0.0
      %990 = vmatpush.msra.mxu0 0.0
      %991 = vmatpush.msra.mxu0 0.0
      %992 = vmatpush.msra.mxu0 0.0
      %993 = vmatpush.msra.mxu0 0.0
      %994 = vmatpush.msra.mxu0 0.0
      %995 = vmatpush.msra.mxu0 0.0
      %996 = vmatpush.msra.mxu0 0.0
      %997 = vmatpush.msra.mxu0 0.0
      %998 = vmatpush.msra.mxu0 0.0
      %999 = vmatpush.msra.mxu0 0.0
      %1000 = vmatpush.msra.mxu0 0.0
      %1001 = vmatpush.msra.mxu0 %v984
      %1002 = vmatmul.f32.gmra.mxu0 %v960
      %v1003 = vpop.f32.mrf.mxu0
      %v1004 = vadd.f32 %v936, %v1003
      %1005 = vmatmul.f32.gmra.mxu0 %v963
      %v1006 = vpop.f32.mrf.mxu0
      %v1007 = vadd.f32 %v939, %v1006
      %1008 = vmatmul.f32.gmra.mxu0 %v966
      %v1009 = vpop.f32.mrf.mxu0
      %v1010 = vadd.f32 %v942, %v1009
      %1011 = vmatmul.f32.gmra.mxu0 %v969
      %v1012 = vpop.f32.mrf.mxu0
      %v1013 = vadd.f32 %v945, %v1012
      %1014 = vmatmul.f32.gmra.mxu0 %v972
      %v1015 = vpop.f32.mrf.mxu0
      %v1016 = vadd.f32 %v948, %v1015
      %1017 = vmatmul.f32.gmra.mxu0 %v975
      %v1018 = vpop.f32.mrf.mxu0
      %v1019 = vadd.f32 %v951, %v1018
      %1020 = vmatmul.f32.gmra.mxu0 %v978
      %v1021 = vpop.f32.mrf.mxu0
      %v1022 = vadd.f32 %v954, %v1021
      %1023 = vmatmul.f32.gmra.mxu0 %v981
      %v1024 = vpop.f32.mrf.mxu0
      %v1025 = vadd.f32 %v957, %v1024
      %1026 = vdwg.mxu0
      %v1027 = vld [vmem:[#allocation2 + $0x2] sm:$0xff]
      %v1028 = vld [vmem:[#allocation2 + $0x12] sm:$0xff]
      %v1029 = vld [vmem:[#allocation2 + $0x22] sm:$0xff]
      %v1030 = vld [vmem:[#allocation2 + $0x32] sm:$0xff]
      %v1031 = vld [vmem:[#allocation2 + $0x42] sm:$0xff]
      %v1032 = vld [vmem:[#allocation2 + $0x52] sm:$0xff]
      %v1033 = vld [vmem:[#allocation2 + $0x62] sm:$0xff]
      %v1034 = vld [vmem:[#allocation2 + $0x72] sm:$0xff]
      %s1035 = scalar_lea.vmem %s1, 8
      %v1036 = vld [vmem:[%s1035] sm:$0xf]
      %v1038 = vsel %vm641, %v1027, 0
      %v1041 = vsel %vm641, %v1028, 0
      %v1044 = vsel %vm641, %v1029, 0
      %v1047 = vsel %vm641, %v1030, 0
      %v1050 = vsel %vm641, %v1031, 0
      %v1053 = vsel %vm641, %v1032, 0
      %v1056 = vsel %vm641, %v1033, 0
      %v1059 = vsel %vm641, %v1034, 0
      %v1062 = vsel %vm914, %v1036, 0
      %1064 = vmatpush.msra.mxu0 0.0
      %1065 = vmatpush.msra.mxu0 0.0
      %1066 = vmatpush.msra.mxu0 0.0
      %1067 = vmatpush.msra.mxu0 0.0
      %1068 = vmatpush.msra.mxu0 0.0
      %1069 = vmatpush.msra.mxu0 0.0
      %1070 = vmatpush.msra.mxu0 0.0
      %1071 = vmatpush.msra.mxu0 0.0
      %1072 = vmatpush.msra.mxu0 0.0
      %1073 = vmatpush.msra.mxu0 0.0
      %1074 = vmatpush.msra.mxu0 0.0
      %1075 = vmatpush.msra.mxu0 0.0
      %1076 = vmatpush.msra.mxu0 0.0
      %1077 = vmatpush.msra.mxu0 0.0
      %1078 = vmatpush.msra.mxu0 0.0
      %1079 = vmatpush.msra.mxu0 %v1062
      %1080 = vmatmul.f32.gmra.mxu0 %v1038
      %v1081 = vpop.f32.mrf.mxu0
      %v1082 = vadd.f32 0.0, %v1081
      %1083 = vmatmul.f32.gmra.mxu0 %v1041
      %v1084 = vpop.f32.mrf.mxu0
      %v1085 = vadd.f32 0.0, %v1084
      %1086 = vmatmul.f32.gmra.mxu0 %v1044
      %v1087 = vpop.f32.mrf.mxu0
      %v1088 = vadd.f32 0.0, %v1087
      %1089 = vmatmul.f32.gmra.mxu0 %v1047
      %v1090 = vpop.f32.mrf.mxu0
      %v1091 = vadd.f32 0.0, %v1090
      %1092 = vmatmul.f32.gmra.mxu0 %v1050
      %v1093 = vpop.f32.mrf.mxu0
      %v1094 = vadd.f32 0.0, %v1093
      %1095 = vmatmul.f32.gmra.mxu0 %v1053
      %v1096 = vpop.f32.mrf.mxu0
      %v1097 = vadd.f32 0.0, %v1096
      %1098 = vmatmul.f32.gmra.mxu0 %v1056
      %v1099 = vpop.f32.mrf.mxu0
      %v1100 = vadd.f32 0.0, %v1099
      %1101 = vmatmul.f32.gmra.mxu0 %v1059
      %v1102 = vpop.f32.mrf.mxu0
      %v1103 = vadd.f32 0.0, %v1102
      %1104 = vdwg.mxu0
      %v1105 = vadd.f32 %v1004, %v1082
      %v1106 = vadd.f32 %v1007, %v1085
      %v1107 = vadd.f32 %v1010, %v1088
      %v1108 = vadd.f32 %v1013, %v1091
      %v1109 = vadd.f32 %v1016, %v1094
      %v1110 = vadd.f32 %v1019, %v1097
      %v1111 = vadd.f32 %v1022, %v1100
      %v1112 = vadd.f32 %v1025, %v1103
      %v1113 = vld [vmem:[%s862] sm:$0xff]
      %v1114 = vld [vmem:[%s862 + $0x10] sm:$0xff]
      %v1115 = vld [vmem:[%s862 + $0x20] sm:$0xff]
      %v1116 = vld [vmem:[%s862 + $0x30] sm:$0xff]
      %v1117 = vld [vmem:[%s862 + $0x40] sm:$0xff]
      %v1118 = vld [vmem:[%s862 + $0x50] sm:$0xff]
      %v1119 = vld [vmem:[%s862 + $0x60] sm:$0xff]
      %v1120 = vld [vmem:[%s862 + $0x70] sm:$0xff]
      %s1121 = scalar_lea.vmem %s1, 12
      %v1122 = vld [vmem:[%s1121] sm:$0xf]
      %v1124 = vsel %vm641, %v1113, 0
      %v1127 = vsel %vm641, %v1114, 0
      %v1130 = vsel %vm641, %v1115, 0
      %v1133 = vsel %vm641, %v1116, 0
      %v1136 = vsel %vm641, %v1117, 0
      %v1139 = vsel %vm641, %v1118, 0
      %v1142 = vsel %vm641, %v1119, 0
      %v1145 = vsel %vm641, %v1120, 0
      %v1148 = vsel %vm914, %v1122, 0
      %1150 = vmatpush.msra.mxu0 0.0
      %1151 = vmatpush.msra.mxu0 0.0
      %1152 = vmatpush.msra.mxu0 0.0
      %1153 = vmatpush.msra.mxu0 0.0
      %1154 = vmatpush.msra.mxu0 0.0
      %1155 = vmatpush.msra.mxu0 0.0
      %1156 = vmatpush.msra.mxu0 0.0
      %1157 = vmatpush.msra.mxu0 0.0
      %1158 = vmatpush.msra.mxu0 0.0
      %1159 = vmatpush.msra.mxu0 0.0
      %1160 = vmatpush.msra.mxu0 0.0
      %1161 = vmatpush.msra.mxu0 0.0
      %1162 = vmatpush.msra.mxu0 0.0
      %1163 = vmatpush.msra.mxu0 0.0
      %1164 = vmatpush.msra.mxu0 0.0
      %1165 = vmatpush.msra.mxu0 %v1148
      %1166 = vmatmul.f32.gmra.mxu0 %v1124
      %v1167 = vpop.f32.mrf.mxu0
      %v1168 = vadd.f32 0.0, %v1167
      %1169 = vmatmul.f32.gmra.mxu0 %v1127
      %v1170 = vpop.f32.mrf.mxu0
      %v1171 = vadd.f32 0.0, %v1170
      %1172 = vmatmul.f32.gmra.mxu0 %v1130
      %v1173 = vpop.f32.mrf.mxu0
      %v1174 = vadd.f32 0.0, %v1173
      %1175 = vmatmul.f32.gmra.mxu0 %v1133
      %v1176 = vpop.f32.mrf.mxu0
      %v1177 = vadd.f32 0.0, %v1176
      %1178 = vmatmul.f32.gmra.mxu0 %v1136
      %v1179 = vpop.f32.mrf.mxu0
      %v1180 = vadd.f32 0.0, %v1179
      %1181 = vmatmul.f32.gmra.mxu0 %v1139
      %v1182 = vpop.f32.mrf.mxu0
      %v1183 = vadd.f32 0.0, %v1182
      %1184 = vmatmul.f32.gmra.mxu0 %v1142
      %v1185 = vpop.f32.mrf.mxu0
      %v1186 = vadd.f32 0.0, %v1185
      %1187 = vmatmul.f32.gmra.mxu0 %v1145
      %v1188 = vpop.f32.mrf.mxu0
      %v1189 = vadd.f32 0.0, %v1188
      %1190 = vdwg.mxu0
      %v1191 = vadd.f32 %v1105, %v1168
      %v1192 = vadd.f32 %v1106, %v1171
      %v1193 = vadd.f32 %v1107, %v1174
      %v1194 = vadd.f32 %v1108, %v1177
      %v1195 = vadd.f32 %v1109, %v1180
      %v1196 = vadd.f32 %v1110, %v1183
      %v1197 = vadd.f32 %v1111, %v1186
      %v1198 = vadd.f32 %v1112, %v1189
      %v1199 = vld [vmem:[%s862 + $0x1] sm:$0xff]
      %v1200 = vld [vmem:[%s862 + $0x11] sm:$0xff]
      %v1201 = vld [vmem:[%s862 + $0x21] sm:$0xff]
      %v1202 = vld [vmem:[%s862 + $0x31] sm:$0xff]
      %v1203 = vld [vmem:[%s862 + $0x41] sm:$0xff]
      %v1204 = vld [vmem:[%s862 + $0x51] sm:$0xff]
      %v1205 = vld [vmem:[%s862 + $0x61] sm:$0xff]
      %v1206 = vld [vmem:[%s862 + $0x71] sm:$0xff]
      %s1207 = scalar_lea.vmem %s1, 16
      %v1208 = vld [vmem:[%s1207] sm:$0xf]
      %v1210 = vsel %vm641, %v1199, 0
      %v1213 = vsel %vm641, %v1200, 0
      %v1216 = vsel %vm641, %v1201, 0
      %v1219 = vsel %vm641, %v1202, 0
      %v1222 = vsel %vm641, %v1203, 0
      %v1225 = vsel %vm641, %v1204, 0
      %v1228 = vsel %vm641, %v1205, 0
      %v1231 = vsel %vm641, %v1206, 0
      %v1234 = vsel %vm914, %v1208, 0
      %1236 = vmatpush.msra.mxu0 0.0
      %1237 = vmatpush.msra.mxu0 0.0
      %1238 = vmatpush.msra.mxu0 0.0
      %1239 = vmatpush.msra.mxu0 0.0
      %1240 = vmatpush.msra.mxu0 0.0
      %1241 = vmatpush.msra.mxu0 0.0
      %1242 = vmatpush.msra.mxu0 0.0
      %1243 = vmatpush.msra.mxu0 0.0
      %1244 = vmatpush.msra.mxu0 0.0
      %1245 = vmatpush.msra.mxu0 0.0
      %1246 = vmatpush.msra.mxu0 0.0
      %1247 = vmatpush.msra.mxu0 0.0
      %1248 = vmatpush.msra.mxu0 0.0
      %1249 = vmatpush.msra.mxu0 0.0
      %1250 = vmatpush.msra.mxu0 0.0
      %1251 = vmatpush.msra.mxu0 %v1234
      %1252 = vmatmul.f32.gmra.mxu0 %v1210
      %v1253 = vpop.f32.mrf.mxu0
      %v1254 = vadd.f32 0.0, %v1253
      %1255 = vmatmul.f32.gmra.mxu0 %v1213
      %v1256 = vpop.f32.mrf.mxu0
      %v1257 = vadd.f32 0.0, %v1256
      %1258 = vmatmul.f32.gmra.mxu0 %v1216
      %v1259 = vpop.f32.mrf.mxu0
      %v1260 = vadd.f32 0.0, %v1259
      %1261 = vmatmul.f32.gmra.mxu0 %v1219
      %v1262 = vpop.f32.mrf.mxu0
      %v1263 = vadd.f32 0.0, %v1262
      %1264 = vmatmul.f32.gmra.mxu0 %v1222
      %v1265 = vpop.f32.mrf.mxu0
      %v1266 = vadd.f32 0.0, %v1265
      %1267 = vmatmul.f32.gmra.mxu0 %v1225
      %v1268 = vpop.f32.mrf.mxu0
      %v1269 = vadd.f32 0.0, %v1268
      %1270 = vmatmul.f32.gmra.mxu0 %v1228
      %v1271 = vpop.f32.mrf.mxu0
      %v1272 = vadd.f32 0.0, %v1271
      %1273 = vmatmul.f32.gmra.mxu0 %v1231
      %v1274 = vpop.f32.mrf.mxu0
      %v1275 = vadd.f32 0.0, %v1274
      %1276 = vdwg.mxu0
      %v1277 = vadd.f32 %v1191, %v1254
      %v1278 = vadd.f32 %v1192, %v1257
      %v1279 = vadd.f32 %v1193, %v1260
      %v1280 = vadd.f32 %v1194, %v1263
      %v1281 = vadd.f32 %v1195, %v1266
      %v1282 = vadd.f32 %v1196, %v1269
      %v1283 = vadd.f32 %v1197, %v1272
      %v1284 = vadd.f32 %v1198, %v1275
      %v1285 = vld [vmem:[%s862 + $0x2] sm:$0xff]
      %v1286 = vld [vmem:[%s862 + $0x12] sm:$0xff]
      %v1287 = vld [vmem:[%s862 + $0x22] sm:$0xff]
      %v1288 = vld [vmem:[%s862 + $0x32] sm:$0xff]
      %v1289 = vld [vmem:[%s862 + $0x42] sm:$0xff]
      %v1290 = vld [vmem:[%s862 + $0x52] sm:$0xff]
      %v1291 = vld [vmem:[%s862 + $0x62] sm:$0xff]
      %v1292 = vld [vmem:[%s862 + $0x72] sm:$0xff]
      %s1293 = scalar_lea.vmem %s1, 20
      %v1294 = vld [vmem:[%s1293] sm:$0xf]
      %v1296 = vsel %vm641, %v1285, 0
      %v1299 = vsel %vm641, %v1286, 0
      %v1302 = vsel %vm641, %v1287, 0
      %v1305 = vsel %vm641, %v1288, 0
      %v1308 = vsel %vm641, %v1289, 0
      %v1311 = vsel %vm641, %v1290, 0
      %v1314 = vsel %vm641, %v1291, 0
      %v1317 = vsel %vm641, %v1292, 0
      %v1320 = vsel %vm914, %v1294, 0
      %1322 = vmatpush.msra.mxu0 0.0
      %1323 = vmatpush.msra.mxu0 0.0
      %1324 = vmatpush.msra.mxu0 0.0
      %1325 = vmatpush.msra.mxu0 0.0
      %1326 = vmatpush.msra.mxu0 0.0
      %1327 = vmatpush.msra.mxu0 0.0
      %1328 = vmatpush.msra.mxu0 0.0
      %1329 = vmatpush.msra.mxu0 0.0
      %1330 = vmatpush.msra.mxu0 0.0
      %1331 = vmatpush.msra.mxu0 0.0
      %1332 = vmatpush.msra.mxu0 0.0
      %1333 = vmatpush.msra.mxu0 0.0
      %1334 = vmatpush.msra.mxu0 0.0
      %1335 = vmatpush.msra.mxu0 0.0
      %1336 = vmatpush.msra.mxu0 0.0
      %1337 = vmatpush.msra.mxu0 %v1320
      %1338 = vmatmul.f32.gmra.mxu0 %v1296
      %v1339 = vpop.f32.mrf.mxu0
      %v1340 = vadd.f32 0.0, %v1339
      %1341 = vmatmul.f32.gmra.mxu0 %v1299
      %v1342 = vpop.f32.mrf.mxu0
      %v1343 = vadd.f32 0.0, %v1342
      %1344 = vmatmul.f32.gmra.mxu0 %v1302
      %v1345 = vpop.f32.mrf.mxu0
      %v1346 = vadd.f32 0.0, %v1345
      %1347 = vmatmul.f32.gmra.mxu0 %v1305
      %v1348 = vpop.f32.mrf.mxu0
      %v1349 = vadd.f32 0.0, %v1348
      %1350 = vmatmul.f32.gmra.mxu0 %v1308
      %v1351 = vpop.f32.mrf.mxu0
      %v1352 = vadd.f32 0.0, %v1351
      %1353 = vmatmul.f32.gmra.mxu0 %v1311
      %v1354 = vpop.f32.mrf.mxu0
      %v1355 = vadd.f32 0.0, %v1354
      %1356 = vmatmul.f32.gmra.mxu0 %v1314
      %v1357 = vpop.f32.mrf.mxu0
      %v1358 = vadd.f32 0.0, %v1357
      %1359 = vmatmul.f32.gmra.mxu0 %v1317
      %v1360 = vpop.f32.mrf.mxu0
      %v1361 = vadd.f32 0.0, %v1360
      %1362 = vdwg.mxu0
      %v1363 = vadd.f32 %v1277, %v1340
      %v1364 = vadd.f32 %v1278, %v1343
      %v1365 = vadd.f32 %v1279, %v1346
      %v1366 = vadd.f32 %v1280, %v1349
      %v1367 = vadd.f32 %v1281, %v1352
      %v1368 = vadd.f32 %v1282, %v1355
      %v1369 = vadd.f32 %v1283, %v1358
      %v1370 = vadd.f32 %v1284, %v1361
      %s1371 = scalar_lea.vmem [#allocation2], 32
      %v1372 = vld [vmem:[%s1371] sm:$0xff]
      %v1373 = vld [vmem:[%s1371 + $0x10] sm:$0xff]
      %v1374 = vld [vmem:[%s1371 + $0x20] sm:$0xff]
      %v1375 = vld [vmem:[%s1371 + $0x30] sm:$0xff]
      %v1376 = vld [vmem:[%s1371 + $0x40] sm:$0xff]
      %v1377 = vld [vmem:[%s1371 + $0x50] sm:$0xff]
      %v1378 = vld [vmem:[%s1371 + $0x60] sm:$0xff]
      %v1379 = vld [vmem:[%s1371 + $0x70] sm:$0xff]
      %s1380 = scalar_lea.vmem %s1, 24
      %v1381 = vld [vmem:[%s1380] sm:$0xf]
      %v1383 = vsel %vm641, %v1372, 0
      %v1386 = vsel %vm641, %v1373, 0
      %v1389 = vsel %vm641, %v1374, 0
      %v1392 = vsel %vm641, %v1375, 0
      %v1395 = vsel %vm641, %v1376, 0
      %v1398 = vsel %vm641, %v1377, 0
      %v1401 = vsel %vm641, %v1378, 0
      %v1404 = vsel %vm641, %v1379, 0
      %v1407 = vsel %vm914, %v1381, 0
      %1409 = vmatpush.msra.mxu0 0.0
      %1410 = vmatpush.msra.mxu0 0.0
      %1411 = vmatpush.msra.mxu0 0.0
      %1412 = vmatpush.msra.mxu0 0.0
      %1413 = vmatpush.msra.mxu0 0.0
      %1414 = vmatpush.msra.mxu0 0.0
      %1415 = vmatpush.msra.mxu0 0.0
      %1416 = vmatpush.msra.mxu0 0.0
      %1417 = vmatpush.msra.mxu0 0.0
      %1418 = vmatpush.msra.mxu0 0.0
      %1419 = vmatpush.msra.mxu0 0.0
      %1420 = vmatpush.msra.mxu0 0.0
      %1421 = vmatpush.msra.mxu0 0.0
      %1422 = vmatpush.msra.mxu0 0.0
      %1423 = vmatpush.msra.mxu0 0.0
      %1424 = vmatpush.msra.mxu0 %v1407
      %1425 = vmatmul.f32.gmra.mxu0 %v1383
      %v1426 = vpop.f32.mrf.mxu0
      %v1427 = vadd.f32 0.0, %v1426
      %1428 = vmatmul.f32.gmra.mxu0 %v1386
      %v1429 = vpop.f32.mrf.mxu0
      %v1430 = vadd.f32 0.0, %v1429
      %1431 = vmatmul.f32.gmra.mxu0 %v1389
      %v1432 = vpop.f32.mrf.mxu0
      %v1433 = vadd.f32 0.0, %v1432
      %1434 = vmatmul.f32.gmra.mxu0 %v1392
      %v1435 = vpop.f32.mrf.mxu0
      %v1436 = vadd.f32 0.0, %v1435
      %1437 = vmatmul.f32.gmra.mxu0 %v1395
      %v1438 = vpop.f32.mrf.mxu0
      %v1439 = vadd.f32 0.0, %v1438
      %1440 = vmatmul.f32.gmra.mxu0 %v1398
      %v1441 = vpop.f32.mrf.mxu0
      %v1442 = vadd.f32 0.0, %v1441
      %1443 = vmatmul.f32.gmra.mxu0 %v1401
      %v1444 = vpop.f32.mrf.mxu0
      %v1445 = vadd.f32 0.0, %v1444
      %1446 = vmatmul.f32.gmra.mxu0 %v1404
      %v1447 = vpop.f32.mrf.mxu0
      %v1448 = vadd.f32 0.0, %v1447
      %1449 = vdwg.mxu0
      %v1450 = vadd.f32 %v1363, %v1427
      %v1451 = vadd.f32 %v1364, %v1430
      %v1452 = vadd.f32 %v1365, %v1433
      %v1453 = vadd.f32 %v1366, %v1436
      %v1454 = vadd.f32 %v1367, %v1439
      %v1455 = vadd.f32 %v1368, %v1442
      %v1456 = vadd.f32 %v1369, %v1445
      %v1457 = vadd.f32 %v1370, %v1448
      %v1458 = vld [vmem:[%s1371 + $0x1] sm:$0xff]
      %v1459 = vld [vmem:[%s1371 + $0x11] sm:$0xff]
      %v1460 = vld [vmem:[%s1371 + $0x21] sm:$0xff]
      %v1461 = vld [vmem:[%s1371 + $0x31] sm:$0xff]
      %v1462 = vld [vmem:[%s1371 + $0x41] sm:$0xff]
      %v1463 = vld [vmem:[%s1371 + $0x51] sm:$0xff]
      %v1464 = vld [vmem:[%s1371 + $0x61] sm:$0xff]
      %v1465 = vld [vmem:[%s1371 + $0x71] sm:$0xff]
      %s1466 = scalar_lea.vmem %s1, 28
      %v1467 = vld [vmem:[%s1466] sm:$0xf]
      %v1469 = vsel %vm641, %v1458, 0
      %v1472 = vsel %vm641, %v1459, 0
      %v1475 = vsel %vm641, %v1460, 0
      %v1478 = vsel %vm641, %v1461, 0
      %v1481 = vsel %vm641, %v1462, 0
      %v1484 = vsel %vm641, %v1463, 0
      %v1487 = vsel %vm641, %v1464, 0
      %v1490 = vsel %vm641, %v1465, 0
      %v1493 = vsel %vm914, %v1467, 0
      %1495 = vmatpush.msra.mxu0 0.0
      %1496 = vmatpush.msra.mxu0 0.0
      %1497 = vmatpush.msra.mxu0 0.0
      %1498 = vmatpush.msra.mxu0 0.0
      %1499 = vmatpush.msra.mxu0 0.0
      %1500 = vmatpush.msra.mxu0 0.0
      %1501 = vmatpush.msra.mxu0 0.0
      %1502 = vmatpush.msra.mxu0 0.0
      %1503 = vmatpush.msra.mxu0 0.0
      %1504 = vmatpush.msra.mxu0 0.0
      %1505 = vmatpush.msra.mxu0 0.0
      %1506 = vmatpush.msra.mxu0 0.0
      %1507 = vmatpush.msra.mxu0 0.0
      %1508 = vmatpush.msra.mxu0 0.0
      %1509 = vmatpush.msra.mxu0 0.0
      %1510 = vmatpush.msra.mxu0 %v1493
      %1511 = vmatmul.f32.gmra.mxu0 %v1469
      %v1512 = vpop.f32.mrf.mxu0
      %v1513 = vadd.f32 0.0, %v1512
      %1514 = vmatmul.f32.gmra.mxu0 %v1472
      %v1515 = vpop.f32.mrf.mxu0
      %v1516 = vadd.f32 0.0, %v1515
      %1517 = vmatmul.f32.gmra.mxu0 %v1475
      %v1518 = vpop.f32.mrf.mxu0
      %v1519 = vadd.f32 0.0, %v1518
      %1520 = vmatmul.f32.gmra.mxu0 %v1478
      %v1521 = vpop.f32.mrf.mxu0
      %v1522 = vadd.f32 0.0, %v1521
      %1523 = vmatmul.f32.gmra.mxu0 %v1481
      %v1524 = vpop.f32.mrf.mxu0
      %v1525 = vadd.f32 0.0, %v1524
      %1526 = vmatmul.f32.gmra.mxu0 %v1484
      %v1527 = vpop.f32.mrf.mxu0
      %v1528 = vadd.f32 0.0, %v1527
      %1529 = vmatmul.f32.gmra.mxu0 %v1487
      %v1530 = vpop.f32.mrf.mxu0
      %v1531 = vadd.f32 0.0, %v1530
      %1532 = vmatmul.f32.gmra.mxu0 %v1490
      %v1533 = vpop.f32.mrf.mxu0
      %v1534 = vadd.f32 0.0, %v1533
      %1535 = vdwg.mxu0
      %v1536 = vadd.f32 %v1450, %v1513
      %v1537 = vadd.f32 %v1451, %v1516
      %v1538 = vadd.f32 %v1452, %v1519
      %v1539 = vadd.f32 %v1453, %v1522
      %v1540 = vadd.f32 %v1454, %v1525
      %v1541 = vadd.f32 %v1455, %v1528
      %v1542 = vadd.f32 %v1456, %v1531
      %v1543 = vadd.f32 %v1457, %v1534
      %v1544 = vld [vmem:[%s1371 + $0x2] sm:$0xff]
      %v1545 = vld [vmem:[%s1371 + $0x12] sm:$0xff]
      %v1546 = vld [vmem:[%s1371 + $0x22] sm:$0xff]
      %v1547 = vld [vmem:[%s1371 + $0x32] sm:$0xff]
      %v1548 = vld [vmem:[%s1371 + $0x42] sm:$0xff]
      %v1549 = vld [vmem:[%s1371 + $0x52] sm:$0xff]
      %v1550 = vld [vmem:[%s1371 + $0x62] sm:$0xff]
      %v1551 = vld [vmem:[%s1371 + $0x72] sm:$0xff]
      %s1552 = scalar_lea.vmem %s1, 32
      %v1553 = vld [vmem:[%s1552] sm:$0xf]
      %v1555 = vsel %vm641, %v1544, 0
      %v1558 = vsel %vm641, %v1545, 0
      %v1561 = vsel %vm641, %v1546, 0
      %v1564 = vsel %vm641, %v1547, 0
      %v1567 = vsel %vm641, %v1548, 0
      %v1570 = vsel %vm641, %v1549, 0
      %v1573 = vsel %vm641, %v1550, 0
      %v1576 = vsel %vm641, %v1551, 0
      %v1579 = vsel %vm914, %v1553, 0
      %1581 = vmatpush.msra.mxu0 0.0
      %1582 = vmatpush.msra.mxu0 0.0
      %1583 = vmatpush.msra.mxu0 0.0
      %1584 = vmatpush.msra.mxu0 0.0
      %1585 = vmatpush.msra.mxu0 0.0
      %1586 = vmatpush.msra.mxu0 0.0
      %1587 = vmatpush.msra.mxu0 0.0
      %1588 = vmatpush.msra.mxu0 0.0
      %1589 = vmatpush.msra.mxu0 0.0
      %1590 = vmatpush.msra.mxu0 0.0
      %1591 = vmatpush.msra.mxu0 0.0
      %1592 = vmatpush.msra.mxu0 0.0
      %1593 = vmatpush.msra.mxu0 0.0
      %1594 = vmatpush.msra.mxu0 0.0
      %1595 = vmatpush.msra.mxu0 0.0
      %1596 = vmatpush.msra.mxu0 %v1579
      %1597 = vmatmul.f32.gmra.mxu0 %v1555
      %v1598 = vpop.f32.mrf.mxu0
      %v1599 = vadd.f32 0.0, %v1598
      %1600 = vmatmul.f32.gmra.mxu0 %v1558
      %v1601 = vpop.f32.mrf.mxu0
      %v1602 = vadd.f32 0.0, %v1601
      %1603 = vmatmul.f32.gmra.mxu0 %v1561
      %v1604 = vpop.f32.mrf.mxu0
      %v1605 = vadd.f32 0.0, %v1604
      %1606 = vmatmul.f32.gmra.mxu0 %v1564
      %v1607 = vpop.f32.mrf.mxu0
      %v1608 = vadd.f32 0.0, %v1607
      %1609 = vmatmul.f32.gmra.mxu0 %v1567
      %v1610 = vpop.f32.mrf.mxu0
      %v1611 = vadd.f32 0.0, %v1610
      %1612 = vmatmul.f32.gmra.mxu0 %v1570
      %v1613 = vpop.f32.mrf.mxu0
      %v1614 = vadd.f32 0.0, %v1613
      %1615 = vmatmul.f32.gmra.mxu0 %v1573
      %v1616 = vpop.f32.mrf.mxu0
      %v1617 = vadd.f32 0.0, %v1616
      %1618 = vmatmul.f32.gmra.mxu0 %v1576
      %v1619 = vpop.f32.mrf.mxu0
      %v1620 = vadd.f32 0.0, %v1619
      %1621 = vdwg.mxu0
      %v1622 = vadd.f32 %v1536, %v1599
      %v1623 = vadd.f32 %v1537, %v1602
      %v1624 = vadd.f32 %v1538, %v1605
      %v1625 = vadd.f32 %v1539, %v1608
      %v1626 = vadd.f32 %v1540, %v1611
      %v1627 = vadd.f32 %v1541, %v1614
      %v1628 = vadd.f32 %v1542, %v1617
      %v1629 = vadd.f32 %v1543, %v1620
      %v1630 = vld [vmem:[%s2] sm:$0x1]
      %v1632 = vperm.slane %v1630, 0
      %v1634 = vadd.f32 %v1622, %v1632
      %v1635 = vadd.f32 %v1623, %v1632
      %v1636 = vadd.f32 %v1624, %v1632
      %v1637 = vadd.f32 %v1625, %v1632
      %v1638 = vadd.f32 %v1626, %v1632
      %v1639 = vadd.f32 %v1627, %v1632
      %v1640 = vadd.f32 %v1628, %v1632
      %v1641 = vadd.f32 %v1629, %v1632
      %v1642 = vmax.f32 %v1634, 0.0
      %v1643 = vmax.f32 %v1635, 0.0
      %v1644 = vmax.f32 %v1636, 0.0
      %v1645 = vmax.f32 %v1637, 0.0
      %v1646 = vmax.f32 %v1638, 0.0
      %v1647 = vmax.f32 %v1639, 0.0
      %v1648 = vmax.f32 %v1640, 0.0
      %v1649 = vmax.f32 %v1641, 0.0
      %vm1650 = vcmask 64512
      %1651 = vst.msk [vmem:[#allocation3] sm:$0xff] %vm1650, 0.0
      %vm1652 = vcmask 58368
      %1653 = vst.msk [vmem:[#allocation3 + $0x8] sm:$0x3] %vm1652, 0.0
      %1654 = vst.msk [vmem:[#allocation3 + $0x10] sm:$0xff] %vm1650, 0.0
      %1655 = vst.msk [vmem:[#allocation3 + $0x18] sm:$0x3] %vm1652, 0.0
      %1656 = vst.msk [vmem:[#allocation3 + $0x20] sm:$0xff] %vm1650, 0.0
      %1657 = vst.msk [vmem:[#allocation3 + $0x28] sm:$0x3] %vm1652, 0.0
      %1658 = vst.msk [vmem:[#allocation3 + $0x30] sm:$0xff] %vm1650, 0.0
      %1659 = vst.msk [vmem:[#allocation3 + $0x38] sm:$0x3] %vm1652, 0.0
      %1660 = vst.msk [vmem:[#allocation3 + $0x40] sm:$0xff] %vm1650, 0.0
      %1661 = vst.msk [vmem:[#allocation3 + $0x48] sm:$0x3] %vm1652, 0.0
      %1662 = vst.msk [vmem:[#allocation3 + $0x50] sm:$0xff] %vm1650, 0.0
      %1663 = vst.msk [vmem:[#allocation3 + $0x58] sm:$0x3] %vm1652, 0.0
      %1664 = vst.msk [vmem:[#allocation3 + $0x60] sm:$0xff] %vm1650, 0.0
      %1665 = vst.msk [vmem:[#allocation3 + $0x68] sm:$0x3] %vm1652, 0.0
      %1666 = vst.msk [vmem:[#allocation3 + $0x70] sm:$0xff] %vm1650, 0.0
      %1667 = vst.msk [vmem:[#allocation3 + $0x78] sm:$0x3] %vm1652, 0.0
      %1668 = vst.msk [vmem:[#allocation3 + $0x80] sm:$0xff] %vm1650, 0.0
      %1669 = vst.msk [vmem:[#allocation3 + $0x88] sm:$0x3] %vm1652, 0.0
      %1670 = vst.msk [vmem:[#allocation3 + $0x90] sm:$0xff] %vm1650, 0.0
      %1671 = vst.msk [vmem:[#allocation3 + $0x98] sm:$0x3] %vm1652, 0.0
      %s1672 = scalar_lea.vmem [#allocation3], 16
      %1673 = vst.msk [vmem:[%s1672 + $0x1] sm:$0xff] %vm1650, %v1642
      %1674 = vst.msk [vmem:[%s1672 + $0x11] sm:$0xff] %vm1650, %v1643
      %1675 = vst.msk [vmem:[%s1672 + $0x21] sm:$0xff] %vm1650, %v1644
      %1676 = vst.msk [vmem:[%s1672 + $0x31] sm:$0xff] %vm1650, %v1645
      %1677 = vst.msk [vmem:[%s1672 + $0x41] sm:$0xff] %vm1650, %v1646
      %1678 = vst.msk [vmem:[%s1672 + $0x51] sm:$0xff] %vm1650, %v1647
      %1679 = vst.msk [vmem:[%s1672 + $0x61] sm:$0xff] %vm1650, %v1648
      %1680 = vst.msk [vmem:[%s1672 + $0x71] sm:$0xff] %vm1650, %v1649
      %v1681 = vld [vmem:[#allocation3] sm:$0xff]
      %v1682 = vld [vmem:[#allocation3 + $0x10] sm:$0xff]
      %v1683 = vld [vmem:[#allocation3 + $0x20] sm:$0xff]
      %v1684 = vld [vmem:[#allocation3 + $0x30] sm:$0xff]
      %v1685 = vld [vmem:[#allocation3 + $0x40] sm:$0xff]
      %v1686 = vld [vmem:[#allocation3 + $0x50] sm:$0xff]
      %v1687 = vld [vmem:[#allocation3 + $0x60] sm:$0xff]
      %v1688 = vld [vmem:[#allocation3 + $0x70] sm:$0xff]
      %v1689 = vld [vmem:[%s3] sm:$0xff]
      %v1690 = vld [vmem:[#allocation3 + $0x1] sm:$0xff]
      %v1691 = vld [vmem:[#allocation3 + $0x11] sm:$0xff]
      %v1692 = vld [vmem:[#allocation3 + $0x21] sm:$0xff]
      %v1693 = vld [vmem:[#allocation3 + $0x31] sm:$0xff]
      %v1694 = vld [vmem:[#allocation3 + $0x41] sm:$0xff]
      %v1695 = vld [vmem:[#allocation3 + $0x51] sm:$0xff]
      %v1696 = vld [vmem:[#allocation3 + $0x61] sm:$0xff]
      %v1697 = vld [vmem:[#allocation3 + $0x71] sm:$0xff]
      %s1698 = scalar_lea.vmem %s3, 8
      %v1699 = vld [vmem:[%s1698] sm:$0xff]
      %v1701 = vsel %vm1650, %v1690, 0
      %v1704 = vsel %vm1650, %v1691, 0
      %v1707 = vsel %vm1650, %v1692, 0
      %v1710 = vsel %vm1650, %v1693, 0
      %v1713 = vsel %vm1650, %v1694, 0
      %v1716 = vsel %vm1650, %v1695, 0
      %v1719 = vsel %vm1650, %v1696, 0
      %v1722 = vsel %vm1650, %v1697, 0
      %1724 = vmatpush.msra.mxu0 0.0
      %1725 = vmatpush.msra.mxu0 0.0
      %1726 = vmatpush.msra.mxu0 0.0
      %1727 = vmatpush.msra.mxu0 0.0
      %1728 = vmatpush.msra.mxu0 0.0
      %1729 = vmatpush.msra.mxu0 0.0
      %1730 = vmatpush.msra.mxu0 0.0
      %1731 = vmatpush.msra.mxu0 0.0
      %1732 = vmatpush.msra.mxu0 0.0
      %1733 = vmatpush.msra.mxu0 0.0
      %1734 = vmatpush.msra.mxu0 0.0
      %1735 = vmatpush.msra.mxu0 0.0
      %1736 = vmatpush.msra.mxu0 0.0
      %1737 = vmatpush.msra.mxu0 0.0
      %1738 = vmatpush.msra.mxu0 0.0
      %1739 = vmatpush.msra.mxu0 %v1699
      %1740 = vmatmul.f32.gmra.mxu0 %v1701
      %v1741 = vpop.f32.mrf.mxu0
      %v1742 = vadd.f32 0.0, %v1741
      %1743 = vmatmul.f32.gmra.mxu0 %v1704
      %v1744 = vpop.f32.mrf.mxu0
      %v1745 = vadd.f32 0.0, %v1744
      %1746 = vmatmul.f32.gmra.mxu0 %v1707
      %v1747 = vpop.f32.mrf.mxu0
      %v1748 = vadd.f32 0.0, %v1747
      %1749 = vmatmul.f32.gmra.mxu0 %v1710
      %v1750 = vpop.f32.mrf.mxu0
      %v1751 = vadd.f32 0.0, %v1750
      %1752 = vmatmul.f32.gmra.mxu0 %v1713
      %v1753 = vpop.f32.mrf.mxu0
      %v1754 = vadd.f32 0.0, %v1753
      %1755 = vmatmul.f32.gmra.mxu0 %v1716
      %v1756 = vpop.f32.mrf.mxu0
      %v1757 = vadd.f32 0.0, %v1756
      %1758 = vmatmul.f32.gmra.mxu0 %v1719
      %v1759 = vpop.f32.mrf.mxu0
      %v1760 = vadd.f32 0.0, %v1759
      %1761 = vmatmul.f32.gmra.mxu0 %v1722
      %v1762 = vpop.f32.mrf.mxu0
      %v1763 = vadd.f32 0.0, %v1762
      %1764 = vdwg.mxu0
      %v1766 = vsel %vm1650, %v1681, 0
      %v1769 = vsel %vm1650, %v1682, 0
      %v1772 = vsel %vm1650, %v1683, 0
      %v1775 = vsel %vm1650, %v1684, 0
      %v1778 = vsel %vm1650, %v1685, 0
      %v1781 = vsel %vm1650, %v1686, 0
      %v1784 = vsel %vm1650, %v1687, 0
      %v1787 = vsel %vm1650, %v1688, 0
      %1789 = vmatpush.msra.mxu0 0.0
      %1790 = vmatpush.msra.mxu0 0.0
      %1791 = vmatpush.msra.mxu0 0.0
      %1792 = vmatpush.msra.mxu0 0.0
      %1793 = vmatpush.msra.mxu0 0.0
      %1794 = vmatpush.msra.mxu0 0.0
      %1795 = vmatpush.msra.mxu0 0.0
      %1796 = vmatpush.msra.mxu0 0.0
      %1797 = vmatpush.msra.mxu0 0.0
      %1798 = vmatpush.msra.mxu0 0.0
      %1799 = vmatpush.msra.mxu0 0.0
      %1800 = vmatpush.msra.mxu0 0.0
      %1801 = vmatpush.msra.mxu0 0.0
      %1802 = vmatpush.msra.mxu0 0.0
      %1803 = vmatpush.msra.mxu0 0.0
      %1804 = vmatpush.msra.mxu0 %v1689
      %1805 = vmatmul.f32.gmra.mxu0 %v1766
      %v1806 = vpop.f32.mrf.mxu0
      %v1807 = vadd.f32 %v1742, %v1806
      %1808 = vmatmul.f32.gmra.mxu0 %v1769
      %v1809 = vpop.f32.mrf.mxu0
      %v1810 = vadd.f32 %v1745, %v1809
      %1811 = vmatmul.f32.gmra.mxu0 %v1772
      %v1812 = vpop.f32.mrf.mxu0
      %v1813 = vadd.f32 %v1748, %v1812
      %1814 = vmatmul.f32.gmra.mxu0 %v1775
      %v1815 = vpop.f32.mrf.mxu0
      %v1816 = vadd.f32 %v1751, %v1815
      %1817 = vmatmul.f32.gmra.mxu0 %v1778
      %v1818 = vpop.f32.mrf.mxu0
      %v1819 = vadd.f32 %v1754, %v1818
      %1820 = vmatmul.f32.gmra.mxu0 %v1781
      %v1821 = vpop.f32.mrf.mxu0
      %v1822 = vadd.f32 %v1757, %v1821
      %1823 = vmatmul.f32.gmra.mxu0 %v1784
      %v1824 = vpop.f32.mrf.mxu0
      %v1825 = vadd.f32 %v1760, %v1824
      %1826 = vmatmul.f32.gmra.mxu0 %v1787
      %v1827 = vpop.f32.mrf.mxu0
      %v1828 = vadd.f32 %v1763, %v1827
      %1829 = vdwg.mxu0
      %v1830 = vld [vmem:[#allocation3 + $0x2] sm:$0xff]
      %v1831 = vld [vmem:[#allocation3 + $0x12] sm:$0xff]
      %v1832 = vld [vmem:[#allocation3 + $0x22] sm:$0xff]
      %v1833 = vld [vmem:[#allocation3 + $0x32] sm:$0xff]
      %v1834 = vld [vmem:[#allocation3 + $0x42] sm:$0xff]
      %v1835 = vld [vmem:[#allocation3 + $0x52] sm:$0xff]
      %v1836 = vld [vmem:[#allocation3 + $0x62] sm:$0xff]
      %v1837 = vld [vmem:[#allocation3 + $0x72] sm:$0xff]
      %s1838 = scalar_lea.vmem %s3, 16
      %v1839 = vld [vmem:[%s1838] sm:$0xff]
      %v1841 = vsel %vm1650, %v1830, 0
      %v1844 = vsel %vm1650, %v1831, 0
      %v1847 = vsel %vm1650, %v1832, 0
      %v1850 = vsel %vm1650, %v1833, 0
      %v1853 = vsel %vm1650, %v1834, 0
      %v1856 = vsel %vm1650, %v1835, 0
      %v1859 = vsel %vm1650, %v1836, 0
      %v1862 = vsel %vm1650, %v1837, 0
      %1864 = vmatpush.msra.mxu0 0.0
      %1865 = vmatpush.msra.mxu0 0.0
      %1866 = vmatpush.msra.mxu0 0.0
      %1867 = vmatpush.msra.mxu0 0.0
      %1868 = vmatpush.msra.mxu0 0.0
      %1869 = vmatpush.msra.mxu0 0.0
      %1870 = vmatpush.msra.mxu0 0.0
      %1871 = vmatpush.msra.mxu0 0.0
      %1872 = vmatpush.msra.mxu0 0.0
      %1873 = vmatpush.msra.mxu0 0.0
      %1874 = vmatpush.msra.mxu0 0.0
      %1875 = vmatpush.msra.mxu0 0.0
      %1876 = vmatpush.msra.mxu0 0.0
      %1877 = vmatpush.msra.mxu0 0.0
      %1878 = vmatpush.msra.mxu0 0.0
      %1879 = vmatpush.msra.mxu0 %v1839
      %1880 = vmatmul.f32.gmra.mxu0 %v1841
      %v1881 = vpop.f32.mrf.mxu0
      %v1882 = vadd.f32 0.0, %v1881
      %1883 = vmatmul.f32.gmra.mxu0 %v1844
      %v1884 = vpop.f32.mrf.mxu0
      %v1885 = vadd.f32 0.0, %v1884
      %1886 = vmatmul.f32.gmra.mxu0 %v1847
      %v1887 = vpop.f32.mrf.mxu0
      %v1888 = vadd.f32 0.0, %v1887
      %1889 = vmatmul.f32.gmra.mxu0 %v1850
      %v1890 = vpop.f32.mrf.mxu0
      %v1891 = vadd.f32 0.0, %v1890
      %1892 = vmatmul.f32.gmra.mxu0 %v1853
      %v1893 = vpop.f32.mrf.mxu0
      %v1894 = vadd.f32 0.0, %v1893
      %1895 = vmatmul.f32.gmra.mxu0 %v1856
      %v1896 = vpop.f32.mrf.mxu0
      %v1897 = vadd.f32 0.0, %v1896
      %1898 = vmatmul.f32.gmra.mxu0 %v1859
      %v1899 = vpop.f32.mrf.mxu0
      %v1900 = vadd.f32 0.0, %v1899
      %1901 = vmatmul.f32.gmra.mxu0 %v1862
      %v1902 = vpop.f32.mrf.mxu0
      %v1903 = vadd.f32 0.0, %v1902
      %1904 = vdwg.mxu0
      %v1905 = vadd.f32 %v1807, %v1882
      %v1906 = vadd.f32 %v1810, %v1885
      %v1907 = vadd.f32 %v1813, %v1888
      %v1908 = vadd.f32 %v1816, %v1891
      %v1909 = vadd.f32 %v1819, %v1894
      %v1910 = vadd.f32 %v1822, %v1897
      %v1911 = vadd.f32 %v1825, %v1900
      %v1912 = vadd.f32 %v1828, %v1903
      %v1913 = vld [vmem:[%s1672] sm:$0xff]
      %v1914 = vld [vmem:[%s1672 + $0x10] sm:$0xff]
      %v1915 = vld [vmem:[%s1672 + $0x20] sm:$0xff]
      %v1916 = vld [vmem:[%s1672 + $0x30] sm:$0xff]
      %v1917 = vld [vmem:[%s1672 + $0x40] sm:$0xff]
      %v1918 = vld [vmem:[%s1672 + $0x50] sm:$0xff]
      %v1919 = vld [vmem:[%s1672 + $0x60] sm:$0xff]
      %v1920 = vld [vmem:[%s1672 + $0x70] sm:$0xff]
      %s1921 = scalar_lea.vmem %s3, 24
      %v1922 = vld [vmem:[%s1921] sm:$0xff]
      %v1924 = vsel %vm1650, %v1913, 0
      %v1927 = vsel %vm1650, %v1914, 0
      %v1930 = vsel %vm1650, %v1915, 0
      %v1933 = vsel %vm1650, %v1916, 0
      %v1936 = vsel %vm1650, %v1917, 0
      %v1939 = vsel %vm1650, %v1918, 0
      %v1942 = vsel %vm1650, %v1919, 0
      %v1945 = vsel %vm1650, %v1920, 0
      %1947 = vmatpush.msra.mxu0 0.0
      %1948 = vmatpush.msra.mxu0 0.0
      %1949 = vmatpush.msra.mxu0 0.0
      %1950 = vmatpush.msra.mxu0 0.0
      %1951 = vmatpush.msra.mxu0 0.0
      %1952 = vmatpush.msra.mxu0 0.0
      %1953 = vmatpush.msra.mxu0 0.0
      %1954 = vmatpush.msra.mxu0 0.0
      %1955 = vmatpush.msra.mxu0 0.0
      %1956 = vmatpush.msra.mxu0 0.0
      %1957 = vmatpush.msra.mxu0 0.0
      %1958 = vmatpush.msra.mxu0 0.0
      %1959 = vmatpush.msra.mxu0 0.0
      %1960 = vmatpush.msra.mxu0 0.0
      %1961 = vmatpush.msra.mxu0 0.0
      %1962 = vmatpush.msra.mxu0 %v1922
      %1963 = vmatmul.f32.gmra.mxu0 %v1924
      %v1964 = vpop.f32.mrf.mxu0
      %v1965 = vadd.f32 0.0, %v1964
      %1966 = vmatmul.f32.gmra.mxu0 %v1927
      %v1967 = vpop.f32.mrf.mxu0
      %v1968 = vadd.f32 0.0, %v1967
      %1969 = vmatmul.f32.gmra.mxu0 %v1930
      %v1970 = vpop.f32.mrf.mxu0
      %v1971 = vadd.f32 0.0, %v1970
      %1972 = vmatmul.f32.gmra.mxu0 %v1933
      %v1973 = vpop.f32.mrf.mxu0
      %v1974 = vadd.f32 0.0, %v1973
      %1975 = vmatmul.f32.gmra.mxu0 %v1936
      %v1976 = vpop.f32.mrf.mxu0
      %v1977 = vadd.f32 0.0, %v1976
      %1978 = vmatmul.f32.gmra.mxu0 %v1939
      %v1979 = vpop.f32.mrf.mxu0
      %v1980 = vadd.f32 0.0, %v1979
      %1981 = vmatmul.f32.gmra.mxu0 %v1942
      %v1982 = vpop.f32.mrf.mxu0
      %v1983 = vadd.f32 0.0, %v1982
      %1984 = vmatmul.f32.gmra.mxu0 %v1945
      %v1985 = vpop.f32.mrf.mxu0
      %v1986 = vadd.f32 0.0, %v1985
      %1987 = vdwg.mxu0
      %v1988 = vadd.f32 %v1905, %v1965
      %v1989 = vadd.f32 %v1906, %v1968
      %v1990 = vadd.f32 %v1907, %v1971
      %v1991 = vadd.f32 %v1908, %v1974
      %v1992 = vadd.f32 %v1909, %v1977
      %v1993 = vadd.f32 %v1910, %v1980
      %v1994 = vadd.f32 %v1911, %v1983
      %v1995 = vadd.f32 %v1912, %v1986
      %v1996 = vld [vmem:[%s1672 + $0x1] sm:$0xff]
      %v1997 = vld [vmem:[%s1672 + $0x11] sm:$0xff]
      %v1998 = vld [vmem:[%s1672 + $0x21] sm:$0xff]
      %v1999 = vld [vmem:[%s1672 + $0x31] sm:$0xff]
      %v2000 = vld [vmem:[%s1672 + $0x41] sm:$0xff]
      %v2001 = vld [vmem:[%s1672 + $0x51] sm:$0xff]
      %v2002 = vld [vmem:[%s1672 + $0x61] sm:$0xff]
      %v2003 = vld [vmem:[%s1672 + $0x71] sm:$0xff]
      %s2004 = scalar_lea.vmem %s3, 32
      %v2005 = vld [vmem:[%s2004] sm:$0xff]
      %v2007 = vsel %vm1650, %v1996, 0
      %v2010 = vsel %vm1650, %v1997, 0
      %v2013 = vsel %vm1650, %v1998, 0
      %v2016 = vsel %vm1650, %v1999, 0
      %v2019 = vsel %vm1650, %v2000, 0
      %v2022 = vsel %vm1650, %v2001, 0
      %v2025 = vsel %vm1650, %v2002, 0
      %v2028 = vsel %vm1650, %v2003, 0
      %2030 = vmatpush.msra.mxu0 0.0
      %2031 = vmatpush.msra.mxu0 0.0
      %2032 = vmatpush.msra.mxu0 0.0
      %2033 = vmatpush.msra.mxu0 0.0
      %2034 = vmatpush.msra.mxu0 0.0
      %2035 = vmatpush.msra.mxu0 0.0
      %2036 = vmatpush.msra.mxu0 0.0
      %2037 = vmatpush.msra.mxu0 0.0
      %2038 = vmatpush.msra.mxu0 0.0
      %2039 = vmatpush.msra.mxu0 0.0
      %2040 = vmatpush.msra.mxu0 0.0
      %2041 = vmatpush.msra.mxu0 0.0
      %2042 = vmatpush.msra.mxu0 0.0
      %2043 = vmatpush.msra.mxu0 0.0
      %2044 = vmatpush.msra.mxu0 0.0
      %2045 = vmatpush.msra.mxu0 %v2005
      %2046 = vmatmul.f32.gmra.mxu0 %v2007
      %v2047 = vpop.f32.mrf.mxu0
      %v2048 = vadd.f32 0.0, %v2047
      %2049 = vmatmul.f32.gmra.mxu0 %v2010
      %v2050 = vpop.f32.mrf.mxu0
      %v2051 = vadd.f32 0.0, %v2050
      %2052 = vmatmul.f32.gmra.mxu0 %v2013
      %v2053 = vpop.f32.mrf.mxu0
      %v2054 = vadd.f32 0.0, %v2053
      %2055 = vmatmul.f32.gmra.mxu0 %v2016
      %v2056 = vpop.f32.mrf.mxu0
      %v2057 = vadd.f32 0.0, %v2056
      %2058 = vmatmul.f32.gmra.mxu0 %v2019
      %v2059 = vpop.f32.mrf.mxu0
      %v2060 = vadd.f32 0.0, %v2059
      %2061 = vmatmul.f32.gmra.mxu0 %v2022
      %v2062 = vpop.f32.mrf.mxu0
      %v2063 = vadd.f32 0.0, %v2062
      %2064 = vmatmul.f32.gmra.mxu0 %v2025
      %v2065 = vpop.f32.mrf.mxu0
      %v2066 = vadd.f32 0.0, %v2065
      %2067 = vmatmul.f32.gmra.mxu0 %v2028
      %v2068 = vpop.f32.mrf.mxu0
      %v2069 = vadd.f32 0.0, %v2068
      %2070 = vdwg.mxu0
      %v2071 = vadd.f32 %v1988, %v2048
      %v2072 = vadd.f32 %v1989, %v2051
      %v2073 = vadd.f32 %v1990, %v2054
      %v2074 = vadd.f32 %v1991, %v2057
      %v2075 = vadd.f32 %v1992, %v2060
      %v2076 = vadd.f32 %v1993, %v2063
      %v2077 = vadd.f32 %v1994, %v2066
      %v2078 = vadd.f32 %v1995, %v2069
      %v2079 = vld [vmem:[%s1672 + $0x2] sm:$0xff]
      %v2080 = vld [vmem:[%s1672 + $0x12] sm:$0xff]
      %v2081 = vld [vmem:[%s1672 + $0x22] sm:$0xff]
      %v2082 = vld [vmem:[%s1672 + $0x32] sm:$0xff]
      %v2083 = vld [vmem:[%s1672 + $0x42] sm:$0xff]
      %v2084 = vld [vmem:[%s1672 + $0x52] sm:$0xff]
      %v2085 = vld [vmem:[%s1672 + $0x62] sm:$0xff]
      %v2086 = vld [vmem:[%s1672 + $0x72] sm:$0xff]
      %s2087 = scalar_lea.vmem %s3, 40
      %v2088 = vld [vmem:[%s2087] sm:$0xff]
      %v2090 = vsel %vm1650, %v2079, 0
      %v2093 = vsel %vm1650, %v2080, 0
      %v2096 = vsel %vm1650, %v2081, 0
      %v2099 = vsel %vm1650, %v2082, 0
      %v2102 = vsel %vm1650, %v2083, 0
      %v2105 = vsel %vm1650, %v2084, 0
      %v2108 = vsel %vm1650, %v2085, 0
      %v2111 = vsel %vm1650, %v2086, 0
      %2113 = vmatpush.msra.mxu0 0.0
      %2114 = vmatpush.msra.mxu0 0.0
      %2115 = vmatpush.msra.mxu0 0.0
      %2116 = vmatpush.msra.mxu0 0.0
      %2117 = vmatpush.msra.mxu0 0.0
      %2118 = vmatpush.msra.mxu0 0.0
      %2119 = vmatpush.msra.mxu0 0.0
      %2120 = vmatpush.msra.mxu0 0.0
      %2121 = vmatpush.msra.mxu0 0.0
      %2122 = vmatpush.msra.mxu0 0.0
      %2123 = vmatpush.msra.mxu0 0.0
      %2124 = vmatpush.msra.mxu0 0.0
      %2125 = vmatpush.msra.mxu0 0.0
      %2126 = vmatpush.msra.mxu0 0.0
      %2127 = vmatpush.msra.mxu0 0.0
      %2128 = vmatpush.msra.mxu0 %v2088
      %2129 = vmatmul.f32.gmra.mxu0 %v2090
      %v2130 = vpop.f32.mrf.mxu0
      %v2131 = vadd.f32 0.0, %v2130
      %2132 = vmatmul.f32.gmra.mxu0 %v2093
      %v2133 = vpop.f32.mrf.mxu0
      %v2134 = vadd.f32 0.0, %v2133
      %2135 = vmatmul.f32.gmra.mxu0 %v2096
      %v2136 = vpop.f32.mrf.mxu0
      %v2137 = vadd.f32 0.0, %v2136
      %2138 = vmatmul.f32.gmra.mxu0 %v2099
      %v2139 = vpop.f32.mrf.mxu0
      %v2140 = vadd.f32 0.0, %v2139
      %2141 = vmatmul.f32.gmra.mxu0 %v2102
      %v2142 = vpop.f32.mrf.mxu0
      %v2143 = vadd.f32 0.0, %v2142
      %2144 = vmatmul.f32.gmra.mxu0 %v2105
      %v2145 = vpop.f32.mrf.mxu0
      %v2146 = vadd.f32 0.0, %v2145
      %2147 = vmatmul.f32.gmra.mxu0 %v2108
      %v2148 = vpop.f32.mrf.mxu0
      %v2149 = vadd.f32 0.0, %v2148
      %2150 = vmatmul.f32.gmra.mxu0 %v2111
      %v2151 = vpop.f32.mrf.mxu0
      %v2152 = vadd.f32 0.0, %v2151
      %2153 = vdwg.mxu0
      %v2154 = vadd.f32 %v2071, %v2131
      %v2155 = vadd.f32 %v2072, %v2134
      %v2156 = vadd.f32 %v2073, %v2137
      %v2157 = vadd.f32 %v2074, %v2140
      %v2158 = vadd.f32 %v2075, %v2143
      %v2159 = vadd.f32 %v2076, %v2146
      %v2160 = vadd.f32 %v2077, %v2149
      %v2161 = vadd.f32 %v2078, %v2152
      %s2162 = scalar_lea.vmem [#allocation3], 32
      %v2163 = vld [vmem:[%s2162] sm:$0xff]
      %v2164 = vld [vmem:[%s2162 + $0x10] sm:$0xff]
      %v2165 = vld [vmem:[%s2162 + $0x20] sm:$0xff]
      %v2166 = vld [vmem:[%s2162 + $0x30] sm:$0xff]
      %v2167 = vld [vmem:[%s2162 + $0x40] sm:$0xff]
      %v2168 = vld [vmem:[%s2162 + $0x50] sm:$0xff]
      %v2169 = vld [vmem:[%s2162 + $0x60] sm:$0xff]
      %v2170 = vld [vmem:[%s2162 + $0x70] sm:$0xff]
      %s2171 = scalar_lea.vmem %s3, 48
      %v2172 = vld [vmem:[%s2171] sm:$0xff]
      %v2174 = vsel %vm1650, %v2163, 0
      %v2177 = vsel %vm1650, %v2164, 0
      %v2180 = vsel %vm1650, %v2165, 0
      %v2183 = vsel %vm1650, %v2166, 0
      %v2186 = vsel %vm1650, %v2167, 0
      %v2189 = vsel %vm1650, %v2168, 0
      %v2192 = vsel %vm1650, %v2169, 0
      %v2195 = vsel %vm1650, %v2170, 0
      %2197 = vmatpush.msra.mxu0 0.0
      %2198 = vmatpush.msra.mxu0 0.0
      %2199 = vmatpush.msra.mxu0 0.0
      %2200 = vmatpush.msra.mxu0 0.0
      %2201 = vmatpush.msra.mxu0 0.0
      %2202 = vmatpush.msra.mxu0 0.0
      %2203 = vmatpush.msra.mxu0 0.0
      %2204 = vmatpush.msra.mxu0 0.0
      %2205 = vmatpush.msra.mxu0 0.0
      %2206 = vmatpush.msra.mxu0 0.0
      %2207 = vmatpush.msra.mxu0 0.0
      %2208 = vmatpush.msra.mxu0 0.0
      %2209 = vmatpush.msra.mxu0 0.0
      %2210 = vmatpush.msra.mxu0 0.0
      %2211 = vmatpush.msra.mxu0 0.0
      %2212 = vmatpush.msra.mxu0 %v2172
      %2213 = vmatmul.f32.gmra.mxu0 %v2174
      %v2214 = vpop.f32.mrf.mxu0
      %v2215 = vadd.f32 0.0, %v2214
      %2216 = vmatmul.f32.gmra.mxu0 %v2177
      %v2217 = vpop.f32.mrf.mxu0
      %v2218 = vadd.f32 0.0, %v2217
      %2219 = vmatmul.f32.gmra.mxu0 %v2180
      %v2220 = vpop.f32.mrf.mxu0
      %v2221 = vadd.f32 0.0, %v2220
      %2222 = vmatmul.f32.gmra.mxu0 %v2183
      %v2223 = vpop.f32.mrf.mxu0
      %v2224 = vadd.f32 0.0, %v2223
      %2225 = vmatmul.f32.gmra.mxu0 %v2186
      %v2226 = vpop.f32.mrf.mxu0
      %v2227 = vadd.f32 0.0, %v2226
      %2228 = vmatmul.f32.gmra.mxu0 %v2189
      %v2229 = vpop.f32.mrf.mxu0
      %v2230 = vadd.f32 0.0, %v2229
      %2231 = vmatmul.f32.gmra.mxu0 %v2192
      %v2232 = vpop.f32.mrf.mxu0
      %v2233 = vadd.f32 0.0, %v2232
      %2234 = vmatmul.f32.gmra.mxu0 %v2195
      %v2235 = vpop.f32.mrf.mxu0
      %v2236 = vadd.f32 0.0, %v2235
      %2237 = vdwg.mxu0
      %v2238 = vadd.f32 %v2154, %v2215
      %v2239 = vadd.f32 %v2155, %v2218
      %v2240 = vadd.f32 %v2156, %v2221
      %v2241 = vadd.f32 %v2157, %v2224
      %v2242 = vadd.f32 %v2158, %v2227
      %v2243 = vadd.f32 %v2159, %v2230
      %v2244 = vadd.f32 %v2160, %v2233
      %v2245 = vadd.f32 %v2161, %v2236
      %v2246 = vld [vmem:[%s2162 + $0x1] sm:$0xff]
      %v2247 = vld [vmem:[%s2162 + $0x11] sm:$0xff]
      %v2248 = vld [vmem:[%s2162 + $0x21] sm:$0xff]
      %v2249 = vld [vmem:[%s2162 + $0x31] sm:$0xff]
      %v2250 = vld [vmem:[%s2162 + $0x41] sm:$0xff]
      %v2251 = vld [vmem:[%s2162 + $0x51] sm:$0xff]
      %v2252 = vld [vmem:[%s2162 + $0x61] sm:$0xff]
      %v2253 = vld [vmem:[%s2162 + $0x71] sm:$0xff]
      %s2254 = scalar_lea.vmem %s3, 56
      %v2255 = vld [vmem:[%s2254] sm:$0xff]
      %v2257 = vsel %vm1650, %v2246, 0
      %v2260 = vsel %vm1650, %v2247, 0
      %v2263 = vsel %vm1650, %v2248, 0
      %v2266 = vsel %vm1650, %v2249, 0
      %v2269 = vsel %vm1650, %v2250, 0
      %v2272 = vsel %vm1650, %v2251, 0
      %v2275 = vsel %vm1650, %v2252, 0
      %v2278 = vsel %vm1650, %v2253, 0
      %2280 = vmatpush.msra.mxu0 0.0
      %2281 = vmatpush.msra.mxu0 0.0
      %2282 = vmatpush.msra.mxu0 0.0
      %2283 = vmatpush.msra.mxu0 0.0
      %2284 = vmatpush.msra.mxu0 0.0
      %2285 = vmatpush.msra.mxu0 0.0
      %2286 = vmatpush.msra.mxu0 0.0
      %2287 = vmatpush.msra.mxu0 0.0
      %2288 = vmatpush.msra.mxu0 0.0
      %2289 = vmatpush.msra.mxu0 0.0
      %2290 = vmatpush.msra.mxu0 0.0
      %2291 = vmatpush.msra.mxu0 0.0
      %2292 = vmatpush.msra.mxu0 0.0
      %2293 = vmatpush.msra.mxu0 0.0
      %2294 = vmatpush.msra.mxu0 0.0
      %2295 = vmatpush.msra.mxu0 %v2255
      %2296 = vmatmul.f32.gmra.mxu0 %v2257
      %v2297 = vpop.f32.mrf.mxu0
      %v2298 = vadd.f32 0.0, %v2297
      %2299 = vmatmul.f32.gmra.mxu0 %v2260
      %v2300 = vpop.f32.mrf.mxu0
      %v2301 = vadd.f32 0.0, %v2300
      %2302 = vmatmul.f32.gmra.mxu0 %v2263
      %v2303 = vpop.f32.mrf.mxu0
      %v2304 = vadd.f32 0.0, %v2303
      %2305 = vmatmul.f32.gmra.mxu0 %v2266
      %v2306 = vpop.f32.mrf.mxu0
      %v2307 = vadd.f32 0.0, %v2306
      %2308 = vmatmul.f32.gmra.mxu0 %v2269
      %v2309 = vpop.f32.mrf.mxu0
      %v2310 = vadd.f32 0.0, %v2309
      %2311 = vmatmul.f32.gmra.mxu0 %v2272
      %v2312 = vpop.f32.mrf.mxu0
      %v2313 = vadd.f32 0.0, %v2312
      %2314 = vmatmul.f32.gmra.mxu0 %v2275
      %v2315 = vpop.f32.mrf.mxu0
      %v2316 = vadd.f32 0.0, %v2315
      %2317 = vmatmul.f32.gmra.mxu0 %v2278
      %v2318 = vpop.f32.mrf.mxu0
      %v2319 = vadd.f32 0.0, %v2318
      %2320 = vdwg.mxu0
      %v2321 = vadd.f32 %v2238, %v2298
      %v2322 = vadd.f32 %v2239, %v2301
      %v2323 = vadd.f32 %v2240, %v2304
      %v2324 = vadd.f32 %v2241, %v2307
      %v2325 = vadd.f32 %v2242, %v2310
      %v2326 = vadd.f32 %v2243, %v2313
      %v2327 = vadd.f32 %v2244, %v2316
      %v2328 = vadd.f32 %v2245, %v2319
      %v2329 = vld [vmem:[%s2162 + $0x2] sm:$0xff]
      %v2330 = vld [vmem:[%s2162 + $0x12] sm:$0xff]
      %v2331 = vld [vmem:[%s2162 + $0x22] sm:$0xff]
      %v2332 = vld [vmem:[%s2162 + $0x32] sm:$0xff]
      %v2333 = vld [vmem:[%s2162 + $0x42] sm:$0xff]
      %v2334 = vld [vmem:[%s2162 + $0x52] sm:$0xff]
      %v2335 = vld [vmem:[%s2162 + $0x62] sm:$0xff]
      %v2336 = vld [vmem:[%s2162 + $0x72] sm:$0xff]
      %s2337 = scalar_lea.vmem %s3, 64
      %v2338 = vld [vmem:[%s2337] sm:$0xff]
      %v2340 = vsel %vm1650, %v2329, 0
      %v2343 = vsel %vm1650, %v2330, 0
      %v2346 = vsel %vm1650, %v2331, 0
      %v2349 = vsel %vm1650, %v2332, 0
      %v2352 = vsel %vm1650, %v2333, 0
      %v2355 = vsel %vm1650, %v2334, 0
      %v2358 = vsel %vm1650, %v2335, 0
      %v2361 = vsel %vm1650, %v2336, 0
      %2363 = vmatpush.msra.mxu0 0.0
      %2364 = vmatpush.msra.mxu0 0.0
      %2365 = vmatpush.msra.mxu0 0.0
      %2366 = vmatpush.msra.mxu0 0.0
      %2367 = vmatpush.msra.mxu0 0.0
      %2368 = vmatpush.msra.mxu0 0.0
      %2369 = vmatpush.msra.mxu0 0.0
      %2370 = vmatpush.msra.mxu0 0.0
      %2371 = vmatpush.msra.mxu0 0.0
      %2372 = vmatpush.msra.mxu0 0.0
      %2373 = vmatpush.msra.mxu0 0.0
      %2374 = vmatpush.msra.mxu0 0.0
      %2375 = vmatpush.msra.mxu0 0.0
      %2376 = vmatpush.msra.mxu0 0.0
      %2377 = vmatpush.msra.mxu0 0.0
      %2378 = vmatpush.msra.mxu0 %v2338
      %2379 = vmatmul.f32.gmra.mxu0 %v2340
      %v2380 = vpop.f32.mrf.mxu0
      %v2381 = vadd.f32 0.0, %v2380
      %2382 = vmatmul.f32.gmra.mxu0 %v2343
      %v2383 = vpop.f32.mrf.mxu0
      %v2384 = vadd.f32 0.0, %v2383
      %2385 = vmatmul.f32.gmra.mxu0 %v2346
      %v2386 = vpop.f32.mrf.mxu0
      %v2387 = vadd.f32 0.0, %v2386
      %2388 = vmatmul.f32.gmra.mxu0 %v2349
      %v2389 = vpop.f32.mrf.mxu0
      %v2390 = vadd.f32 0.0, %v2389
      %2391 = vmatmul.f32.gmra.mxu0 %v2352
      %v2392 = vpop.f32.mrf.mxu0
      %v2393 = vadd.f32 0.0, %v2392
      %2394 = vmatmul.f32.gmra.mxu0 %v2355
      %v2395 = vpop.f32.mrf.mxu0
      %v2396 = vadd.f32 0.0, %v2395
      %2397 = vmatmul.f32.gmra.mxu0 %v2358
      %v2398 = vpop.f32.mrf.mxu0
      %v2399 = vadd.f32 0.0, %v2398
      %2400 = vmatmul.f32.gmra.mxu0 %v2361
      %v2401 = vpop.f32.mrf.mxu0
      %v2402 = vadd.f32 0.0, %v2401
      %2403 = vdwg.mxu0
      %v2404 = vadd.f32 %v2321, %v2381
      %v2405 = vadd.f32 %v2322, %v2384
      %v2406 = vadd.f32 %v2323, %v2387
      %v2407 = vadd.f32 %v2324, %v2390
      %v2408 = vadd.f32 %v2325, %v2393
      %v2409 = vadd.f32 %v2326, %v2396
      %v2410 = vadd.f32 %v2327, %v2399
      %v2411 = vadd.f32 %v2328, %v2402
      %v2412 = vld [vmem:[%s4] sm:$0x1]
      %v2414 = vperm.slane %v2412, 0
      %v2416 = vadd.f32 %v2404, %v2414
      %v2417 = vadd.f32 %v2405, %v2414
      %v2418 = vadd.f32 %v2406, %v2414
      %v2419 = vadd.f32 %v2407, %v2414
      %v2420 = vadd.f32 %v2408, %v2414
      %v2421 = vadd.f32 %v2409, %v2414
      %v2422 = vadd.f32 %v2410, %v2414
      %v2423 = vadd.f32 %v2411, %v2414
      %v2424 = vmax.f32 %v2416, 0.0
      %v2425 = vmax.f32 %v2417, 0.0
      %v2426 = vmax.f32 %v2418, 0.0
      %v2427 = vmax.f32 %v2419, 0.0
      %v2428 = vmax.f32 %v2420, 0.0
      %v2429 = vmax.f32 %v2421, 0.0
      %v2430 = vmax.f32 %v2422, 0.0
      %v2431 = vmax.f32 %v2423, 0.0
      %2432 = vst.msk [vmem:[%s224] sm:$0xff] %vm1650, %v2424
      %2433 = vst.msk [vmem:[%s224 + $0x8] sm:$0xff] %vm1650, %v2425
      %2434 = vst.msk [vmem:[%s224 + $0x10] sm:$0xff] %vm1650, %v2426
      %2435 = vst.msk [vmem:[%s224 + $0x18] sm:$0xff] %vm1650, %v2427
      %2436 = vst.msk [vmem:[%s224 + $0x20] sm:$0xff] %vm1650, %v2428
      %2437 = vst.msk [vmem:[%s224 + $0x28] sm:$0xff] %vm1650, %v2429
      %2438 = vst.msk [vmem:[%s224 + $0x30] sm:$0xff] %vm1650, %v2430
      %2439 = vst.msk [vmem:[%s224 + $0x38] sm:$0xff] %vm1650, %v2431
      %p2440 = scmp.lt.s32.totalorder %s16, 1
      %s2441 = scalar_select %p2440, %s16, 1
      %s2442 = smul.addr %s2441, 8
      %s2443 = smul.addr %s2442, 8
      %s2444 = scalar_lea.vmem %s5, %s2443
      // Predicated region
      $region41: #{down_forward.1} parent=39 // pred_check
        %p2445 = pneg %p144
      $region42: #{down_forward.1} parent=39 // pred_check_branch
        %2447 = sbr.rel (%p2445) target = $region44
      $region43: #{down_forward.1} parent=39 // pred_region
        _
      $region44: #{down_forward.1} parent=39 // pred_fallthru
        _
    $region40: #{down_forward.1} parent=5 // pred_fallthru
      _
    %p2448 = scmp.le.s32.totalorder 2, %s11
    // Predicated region
    $region45: #{down_forward.1} parent=5 // pred_check
      %p2449 = pneg %p2448
    $region46: #{down_forward.1} parent=5 // pred_check_branch
      %2451 = sbr.rel (%p2449) target = $region48
    $region47: #{down_forward.1} parent=5 // pred_region
      %s2452 = ssub.s32 %s11, 2
      // Predicated region
      $region49: #{down_forward.1} parent=47 // pred_check
        %p2453 = pneg %p150
      $region50: #{down_forward.1} parent=47 // pred_check_branch
        %2455 = sbr.rel (%p2453) target = $region52
      $region51: #{down_forward.1} parent=47 // pred_region
        %p2456 = scmp.lt.s32.totalorder %s17, 1
        %s2457 = scalar_select %p2456, %s17, 1
        %s2458 = smul.addr %s2457, 8
        %s2459 = smul.addr %s2458, 8
        %s2460 = scalar_lea.vmem %s5, %s2459
      $region52: #{down_forward.1} parent=47 // pred_fallthru
        _
    $region48: #{down_forward.1} parent=5 // pred_fallthru
      _
  $region6: #{down_forward.1} parent=0 // loop_footer
    %s15 = sadd.s32 1, %s11
  $region7: #{down_forward.1} parent=0 // loop_footer_branch
    %10 = sbr.rel target = $region3
  $region8: #{down_forward.1} parent=0 // loop_exit
    _

</llo_original>
